<compile_context>
chip_gen: v5e
topology: v5e:2x2
jax: 0.10.0
libtpu: 0.0.40
codegen_flags: <defaults>
</compile_context>

<pallas_src>
import math
import functools

import jax
import jax.numpy as jnp
from jax.experimental import pallas as pl
from jax.experimental.pallas import tpu as pltpu


def _disblock_kernel(x_ref, g1_ref, be1_ref, wq_ref, wkv_ref, wproj_ref,
                     bproj_ref, g2_ref, be2_ref, w1_ref, b1_ref, w2_ref,
                     b2_ref, o_ref, k_scr, v_scr, o_scr,
                     *, eps, act, gain, num_heads):
    phase = pl.program_id(1)
    j = pl.program_id(2)
    TQ, C = x_ref.shape[1], x_ref.shape[2]
    H = num_heads
    Dh = C // H
    cd = wq_ref.dtype                    # matmul-operand dtype (bf16 or f32)
    f32 = jnp.float32

    def layernorm(v, g, b):              # all f32
        mu = jnp.mean(v, axis=-1, keepdims=True)
        var = jnp.mean((v - mu) ** 2, axis=-1, keepdims=True)
        return (v - mu) * jax.lax.rsqrt(var + eps) * g + b

    g1 = g1_ref[0].astype(f32)
    be1 = be1_ref[0].astype(f32)
    x_t = x_ref[0].astype(f32)                               # (TQ, C) this tile
    xn_t = layernorm(x_t, g1, be1).astype(cd)                # (TQ, C)

    # -------- phase 0: K/V projection for this row block (one wide matmul) --
    @pl.when(phase == 0)
    def _():
        kv = jnp.dot(xn_t, wkv_ref[...],
                     preferred_element_type=f32).astype(cd)  # (TQ, 2C)
        row0 = pl.multiple_of(j * TQ, TQ)
        for h in range(H):                                   # static unroll
            k_scr[h, pl.ds(row0, TQ), :] = kv[:, h * Dh:(h + 1) * Dh]
            v_scr[h, pl.ds(row0, TQ), :] = kv[:, C + h * Dh:C + (h + 1) * Dh]

    # -------- phase 1: attention + MLP for this q-tile ----------------------
    # NOTE: correctness relies on the (phase, j) axes iterating sequentially
    # (both marked "arbitrary"); only the batch axis may be "parallel".
    @pl.when(phase == 1)
    def _():
        # Q for the whole tile in one wide matmul (scale folded into Wq).
        q_all = jnp.dot(xn_t, wq_ref[...],
                        preferred_element_type=f32).astype(cd)   # (TQ, C)

        for h in range(H):                                   # static unroll
            qh = q_all[:, h * Dh:(h + 1) * Dh]               # (TQ, Dh)
            s = jax.lax.dot_general(qh, k_scr[h],
                                    (((1,), (1,)), ((), ())),
                                    preferred_element_type=f32)  # (TQ, N)
            s = s - jnp.max(s, axis=-1, keepdims=True)
            p = jnp.exp(s)
            denom = jnp.sum(p, axis=-1, keepdims=True)
            oh = jnp.dot(p.astype(cd), v_scr[h],
                         preferred_element_type=f32)         # (TQ, Dh)
            # Normalize after P@V (cheaper than scaling the (TQ,N) p matrix).
            oh = oh * pl.reciprocal(denom, approx=True)
            o_scr[:, h * Dh:(h + 1) * Dh] = oh.astype(cd)

        attn = jnp.dot(o_scr[...], wproj_ref[...],
                       preferred_element_type=f32) + bproj_ref[0].astype(f32)

        x1 = (x_t + attn) if gain == 1.0 else gain * (x_t + attn)   # residual 1

        x1n = layernorm(x1, g2_ref[0].astype(f32),
                        be2_ref[0].astype(f32)).astype(cd)
        hdn = jnp.dot(x1n, w1_ref[...], preferred_element_type=f32) \
            + b1_ref[0].astype(f32)
        if act == "gelu":
            hdn = hdn * 0.5 * (1.0 + jax.lax.erf(hdn * (1.0 / math.sqrt(2.0))))
        elif act == "leakyrelu":
            hdn = jnp.where(hdn >= 0, hdn, 0.2 * hdn)
        else:
            raise ValueError(f"unsupported act: {act}")
        mlp = jnp.dot(hdn.astype(cd), w2_ref[...],
                      preferred_element_type=f32) + b2_ref[0].astype(f32)

        out = (x1 + mlp) if gain == 1.0 else gain * (x1 + mlp)      # residual 2
        o_ref[0] = out.astype(o_ref.dtype)


def disblock_forward(x, params, *, num_heads, tq=None, act="leakyrelu",
                     compute_dtype=jnp.bfloat16, gain=1.0):
    B, N, C = x.shape
    assert C % num_heads == 0
    H = num_heads
    Dh = C // H
    scale = Dh ** (-0.5)
    Hm = params["w1"].shape[1]
    cd = compute_dtype

    if tq is None:
        tq = N
        for cand in (512, 256, 128):
            if N % cand == 0:
                tq = cand
                break
    assert N % tq == 0 and (tq % 8 == 0 or tq == N)
    nj = N // tq

    # Host-side weight prep: scale folded into Wq; K|V concatenated so phase 0
    # runs one (tq,C)@(C,2C) matmul.  Column layout stays head-interleaved
    # (col c -> head c//Dh, dim c%Dh), matching Wproj's input rows.
    wqkv = params["wqkv"]                                   # (C, 3C), (in, out)
    wq = (wqkv[:, 0 * C:1 * C] * scale).astype(cd)          # (C, C)
    wkv = wqkv[:, 1 * C:3 * C].astype(cd)                   # (C, 2C)
    wproj = params["wproj"].astype(cd)                      # (C, C)
    w1 = params["w1"].astype(cd)                            # (C, Hm)
    w2 = params["w2"].astype(cd)                            # (Hm, C)

    kernel = functools.partial(_disblock_kernel, eps=1e-5, act=act, gain=gain,
                               num_heads=H)

    def const(shape):
        zeros = (0,) * len(shape)
        return pl.BlockSpec(shape, lambda b, p, j, z=zeros: z)

    in_specs = [
        pl.BlockSpec((1, tq, C), lambda b, p, j: (b, j, 0)),   # x (tile only)
        const((1, C)), const((1, C)),                          # ln1 gamma, beta
        const((C, C)),                                         # Wq (scaled)
        const((C, 2 * C)),                                     # Wk | Wv
        const((C, C)), const((1, C)),                          # Wproj, bproj
        const((1, C)), const((1, C)),                          # ln2 gamma, beta
        const((C, Hm)), const((1, Hm)),                        # W_fc1, b_fc1
        const((Hm, C)), const((1, C)),                         # W_fc2, b_fc2
    ]

    # Output block index is (b, j*phase): phase-0 steps all map to block (b,0),
    # which is only written back after phase-1 j==0 fills it (accumulator-style
    # revisit), so no uninitialized data ever reaches HBM.
    out_specs = pl.BlockSpec((1, tq, C), lambda b, p, j: (b, j * p, 0))

    fn = pl.pallas_call(
        kernel,
        out_shape=jax.ShapeDtypeStruct((B, N, C), x.dtype),
        grid=(B, 2, nj),
        in_specs=in_specs,
        out_specs=out_specs,
        scratch_shapes=[pltpu.VMEM((H, N, Dh), cd),            # K scratch
                        pltpu.VMEM((H, N, Dh), cd),            # V scratch
                        pltpu.VMEM((tq, C), cd)],              # per-tile head outs
        compiler_params=pltpu.CompilerParams(
            dimension_semantics=("parallel", "arbitrary", "arbitrary"),
            vmem_limit_bytes=48 * 1024 * 1024),
    )
    return fn(x, params["g1"], params["be1"], wq, wkv, wproj, params["bproj"],
              params["g2"], params["be2"], w1, params["b1"], w2, params["b2"])


def disblock_reference(x, params, *, num_heads, act="leakyrelu", gain=1.0):
    """Pure-JAX reference matching the PyTorch DisBlock forward (eval mode)."""
    B, N, C = x.shape
    Dh = C // num_heads
    scale = Dh ** (-0.5)

    def ln(v, g, b):
        mu = jnp.mean(v, axis=-1, keepdims=True)
        var = jnp.mean((v - mu) ** 2, axis=-1, keepdims=True)
        return (v - mu) * jax.lax.rsqrt(var + 1e-5) * g + b

    xn = ln(x, params["g1"][0], params["be1"][0])
    qkv = xn @ params["wqkv"]
    q, k, v = jnp.split(qkv, 3, axis=-1)
    q = q.reshape(B, N, num_heads, Dh).transpose(0, 2, 1, 3)
    k = k.reshape(B, N, num_heads, Dh).transpose(0, 2, 1, 3)
    v = v.reshape(B, N, num_heads, Dh).transpose(0, 2, 1, 3)
    attn = jnp.einsum("bhnd,bhmd->bhnm", q, k) * scale
    attn = jax.nn.softmax(attn, axis=-1)
    out = jnp.einsum("bhnm,bhmd->bhnd", attn, v).transpose(0, 2, 1, 3).reshape(B, N, C)
    out = out @ params["wproj"] + params["bproj"][0]
    x1 = gain * x + gain * out

    x1n = ln(x1, params["g2"][0], params["be2"][0])
    h = x1n @ params["w1"] + params["b1"][0]
    if act == "gelu":
        h = h * 0.5 * (1.0 + jax.lax.erf(h / math.sqrt(2.0)))
    else:
        h = jnp.where(h >= 0, h, 0.2 * h)
    mlp = h @ params["w2"] + params["b2"][0]
    return gain * x1 + gain * mlp


if __name__ == "__main__":
    B, N, C = 2, 16, 32
    num_heads = 4
    Hm = int(C * 4.0)

    key = jax.random.PRNGKey(0)
    ks = jax.random.split(key, 8)

    params = {
        "g1":    jnp.ones((1, C), jnp.float32),
        "be1":   jnp.zeros((1, C), jnp.float32),
        "wqkv":  jax.random.normal(ks[0], (C, 3 * C), jnp.float32) * 0.05,
        "wproj": jax.random.normal(ks[1], (C, C), jnp.float32) * 0.05,
        "bproj": jax.random.normal(ks[2], (1, C), jnp.float32) * 0.01,
        "g2":    jnp.ones((1, C), jnp.float32),
        "be2":   jnp.zeros((1, C), jnp.float32),
        "w1":    jax.random.normal(ks[3], (C, Hm), jnp.float32) * 0.05,
        "b1":    jax.random.normal(ks[4], (1, Hm), jnp.float32) * 0.01,
        "w2":    jax.random.normal(ks[5], (Hm, C), jnp.float32) * 0.05,
        "b2":    jax.random.normal(ks[6], (1, C), jnp.float32) * 0.01,
    }
    x = jax.random.normal(ks[7], (B, N, C), jnp.float32)

    # f32 operand path (tight tolerance), both supported MLP activations,
    # tq=8 -> 2 q-tiles per batch element (exercises both grid phases).
    for act in ("leakyrelu", "gelu"):
        y = disblock_forward(x, params, num_heads=num_heads, tq=8, act=act,
                             compute_dtype=jnp.float32)
        jax.block_until_ready(y)
        y_ref = disblock_reference(x, params, num_heads=num_heads, act=act)
        assert jnp.allclose(y, y_ref, atol=3e-3, rtol=3e-3), (
            act, float(jnp.max(jnp.abs(y - y_ref))))

    # Default bf16 matmul-operand path (f32 accumulation, f32 elementwise math).
    y16 = disblock_forward(x, params, num_heads=num_heads, tq=8, act="gelu")
    jax.block_until_ready(y16)
    y_ref = disblock_reference(x, params, num_heads=num_heads, act="gelu")
    assert jnp.allclose(y16, y_ref, atol=1e-1, rtol=1e-1), (
        float(jnp.max(jnp.abs(y16 - y_ref))))

    print("KERNEL_OK")
</pallas_src>

<mosaic_0001>
module attributes {stable_mosaic.version = 11 : i64} {
  func.func @_disblock_kernel(%arg0: i32, %arg1: i32, %arg2: i32, %arg3: memref<1x8x32xf32, #tpu.memory_space<vmem>>, %arg4: memref<1x32xf32, #tpu.memory_space<vmem>>, %arg5: memref<1x32xf32, #tpu.memory_space<vmem>>, %arg6: memref<32x32xf32, #tpu.memory_space<vmem>>, %arg7: memref<32x64xf32, #tpu.memory_space<vmem>>, %arg8: memref<32x32xf32, #tpu.memory_space<vmem>>, %arg9: memref<1x32xf32, #tpu.memory_space<vmem>>, %arg10: memref<1x32xf32, #tpu.memory_space<vmem>>, %arg11: memref<1x32xf32, #tpu.memory_space<vmem>>, %arg12: memref<32x128xf32, #tpu.memory_space<vmem>>, %arg13: memref<1x128xf32, #tpu.memory_space<vmem>>, %arg14: memref<128x32xf32, #tpu.memory_space<vmem>>, %arg15: memref<1x32xf32, #tpu.memory_space<vmem>>, %arg16: memref<1x8x32xf32, #tpu.memory_space<vmem>>, %arg17: memref<4x16x8xf32, #tpu.memory_space<vmem>>, %arg18: memref<4x16x8xf32, #tpu.memory_space<vmem>>, %arg19: memref<8x32xf32, #tpu.memory_space<vmem>>) attributes {dimension_semantics = [#tpu.dimension_semantics<parallel>, #tpu.dimension_semantics<arbitrary>, #tpu.dimension_semantics<arbitrary>], iteration_bounds = array<i64: 2, 2, 2>, scalar_prefetch = 0 : i64, scratch_operands = 3 : i64, tpu.core_type = #tpu.core_type<tc>, window_params = [{transform_indices = @transform_0, window_bounds = array<i64: 1, 8, 32>}, {pipeline_mode = #tpu.pipeline_mode<synchronous>, transform_indices = @transform_1, window_bounds = array<i64: 1, 32>}, {pipeline_mode = #tpu.pipeline_mode<synchronous>, transform_indices = @transform_2, window_bounds = array<i64: 1, 32>}, {pipeline_mode = #tpu.pipeline_mode<synchronous>, transform_indices = @transform_3, window_bounds = array<i64: 32, 32>}, {pipeline_mode = #tpu.pipeline_mode<synchronous>, transform_indices = @transform_4, window_bounds = array<i64: 32, 64>}, {pipeline_mode = #tpu.pipeline_mode<synchronous>, transform_indices = @transform_5, window_bounds = array<i64: 32, 32>}, {pipeline_mode = #tpu.pipeline_mode<synchronous>, transform_indices = @transform_6, window_bounds = array<i64: 1, 32>}, {pipeline_mode = #tpu.pipeline_mode<synchronous>, transform_indices = @transform_7, window_bounds = array<i64: 1, 32>}, {pipeline_mode = #tpu.pipeline_mode<synchronous>, transform_indices = @transform_8, window_bounds = array<i64: 1, 32>}, {pipeline_mode = #tpu.pipeline_mode<synchronous>, transform_indices = @transform_9, window_bounds = array<i64: 32, 128>}, {pipeline_mode = #tpu.pipeline_mode<synchronous>, transform_indices = @transform_10, window_bounds = array<i64: 1, 128>}, {pipeline_mode = #tpu.pipeline_mode<synchronous>, transform_indices = @transform_11, window_bounds = array<i64: 128, 32>}, {pipeline_mode = #tpu.pipeline_mode<synchronous>, transform_indices = @transform_12, window_bounds = array<i64: 1, 32>}, {transform_indices = @transform_13, window_bounds = array<i64: 1, 8, 32>}]} {
    %c0 = arith.constant 0 : index
    %c0_0 = arith.constant 0 : index
    %0 = vector.load %arg4[%c0, %c0_0] : memref<1x32xf32, #tpu.memory_space<vmem>>, vector<1x32xf32>
    %1 = vector.shape_cast %0 : vector<1x32xf32> to vector<32xf32>
    %c0_1 = arith.constant 0 : index
    %c0_2 = arith.constant 0 : index
    %2 = vector.load %arg5[%c0_1, %c0_2] : memref<1x32xf32, #tpu.memory_space<vmem>>, vector<1x32xf32>
    %3 = vector.shape_cast %2 : vector<1x32xf32> to vector<32xf32>
    %c0_3 = arith.constant 0 : index
    %c0_4 = arith.constant 0 : index
    %c0_5 = arith.constant 0 : index
    %4 = vector.load %arg3[%c0_3, %c0_4, %c0_5] : memref<1x8x32xf32, #tpu.memory_space<vmem>>, vector<1x8x32xf32>
    %5 = vector.shape_cast %4 : vector<1x8x32xf32> to vector<8x32xf32>
    %cst = arith.constant dense<0.000000e+00> : vector<8xf32>
    %6 = vector.multi_reduction <add>, %5, %cst [1] : vector<8x32xf32> to vector<8xf32>
    %7 = vector.shape_cast %6 : vector<8xf32> to vector<8x1xf32>
    %cst_6 = arith.constant 3.200000e+01 : f32
    %8 = vector.broadcast %cst_6 : f32 to vector<8x1xf32>
    %9 = arith.divf %7, %8 : vector<8x1xf32>
    %10 = vector.broadcast %9 : vector<8x1xf32> to vector<8x32xf32>
    %11 = arith.subf %5, %10 : vector<8x32xf32>
    %12 = arith.mulf %11, %11 : vector<8x32xf32>
    %cst_7 = arith.constant dense<0.000000e+00> : vector<8xf32>
    %13 = vector.multi_reduction <add>, %12, %cst_7 [1] : vector<8x32xf32> to vector<8xf32>
    %14 = vector.shape_cast %13 : vector<8xf32> to vector<8x1xf32>
    %cst_8 = arith.constant 3.200000e+01 : f32
    %15 = vector.broadcast %cst_8 : f32 to vector<8x1xf32>
    %16 = arith.divf %14, %15 : vector<8x1xf32>
    %17 = vector.broadcast %9 : vector<8x1xf32> to vector<8x32xf32>
    %18 = arith.subf %5, %17 : vector<8x32xf32>
    %cst_9 = arith.constant 9.99999974E-6 : f32
    %19 = vector.broadcast %cst_9 : f32 to vector<8x1xf32>
    %20 = arith.addf %16, %19 : vector<8x1xf32>
    %21 = math.rsqrt %20 : vector<8x1xf32>
    %22 = vector.broadcast %21 : vector<8x1xf32> to vector<8x32xf32>
    %23 = arith.mulf %18, %22 : vector<8x32xf32>
    %24 = vector.shape_cast %1 : vector<32xf32> to vector<1x32xf32>
    %25 = vector.broadcast %24 : vector<1x32xf32> to vector<8x32xf32>
    %26 = arith.mulf %23, %25 : vector<8x32xf32>
    %27 = vector.shape_cast %3 : vector<32xf32> to vector<1x32xf32>
    %28 = vector.broadcast %27 : vector<1x32xf32> to vector<8x32xf32>
    %29 = arith.addf %26, %28 : vector<8x32xf32>
    %c0_i32 = arith.constant 0 : i32
    %30 = arith.cmpi eq, %arg1, %c0_i32 : i32
    %31 = arith.extui %30 : i1 to i32
    %c0_i32_10 = arith.constant 0 : i32
    %32 = arith.cmpi ne, %31, %c0_i32_10 : i32
    scf.if %32 {
      %c0_12 = arith.constant 0 : index
      %c0_13 = arith.constant 0 : index
      %36 = vector.load %arg7[%c0_12, %c0_13] : memref<32x64xf32, #tpu.memory_space<vmem>>, vector<32x64xf32>
      %cst_14 = arith.constant dense<0.000000e+00> : vector<8x64xf32>
      %37 = tpu.matmul %29, %36, %cst_14 {dimension_numbers = #tpu.dot_dimension_numbers<[1], [0], [0], [1], [0, 0, 1, 1], [], []>} : vector<8x32xf32>, vector<32x64xf32>, vector<8x64xf32> -> vector<8x64xf32>
      %c8_i32 = arith.constant 8 : i32
      %38 = arith.muli %arg2, %c8_i32 : i32
      %39 = tpu.assume_multiple %38, 8 : i32
      %40 = vector.extract_strided_slice %37 {offsets = [0, 0], sizes = [8, 8], strides = [1, 1]} : vector<8x64xf32> to vector<8x8xf32>
      %c0_15 = arith.constant 0 : index
      %41 = arith.index_cast %39 : i32 to index
      %c0_16 = arith.constant 0 : index
      %42 = vector.load %arg17[%c0_15, %41, %c0_16] : memref<4x16x8xf32, #tpu.memory_space<vmem>>, vector<1x8x8xf32>
      %43 = vector.shape_cast %42 : vector<1x8x8xf32> to vector<8x8xf32>
      %44 = vector.shape_cast %40 : vector<8x8xf32> to vector<1x8x8xf32>
      tpu.vector_store %arg17[%c0_15, %41, %c0_16], %44 {strides = array<i32>} : memref<4x16x8xf32, #tpu.memory_space<vmem>>, vector<1x8x8xf32>,
      %45 = vector.extract_strided_slice %37 {offsets = [0, 32], sizes = [8, 8], strides = [1, 1]} : vector<8x64xf32> to vector<8x8xf32>
      %c0_17 = arith.constant 0 : index
      %46 = arith.index_cast %39 : i32 to index
      %c0_18 = arith.constant 0 : index
      %47 = vector.load %arg18[%c0_17, %46, %c0_18] : memref<4x16x8xf32, #tpu.memory_space<vmem>>, vector<1x8x8xf32>
      %48 = vector.shape_cast %47 : vector<1x8x8xf32> to vector<8x8xf32>
      %49 = vector.shape_cast %45 : vector<8x8xf32> to vector<1x8x8xf32>
      tpu.vector_store %arg18[%c0_17, %46, %c0_18], %49 {strides = array<i32>} : memref<4x16x8xf32, #tpu.memory_space<vmem>>, vector<1x8x8xf32>,
      %50 = vector.extract_strided_slice %37 {offsets = [0, 8], sizes = [8, 8], strides = [1, 1]} : vector<8x64xf32> to vector<8x8xf32>
      %c1 = arith.constant 1 : index
      %51 = arith.index_cast %39 : i32 to index
      %c0_19 = arith.constant 0 : index
      %52 = vector.load %arg17[%c1, %51, %c0_19] : memref<4x16x8xf32, #tpu.memory_space<vmem>>, vector<1x8x8xf32>
      %53 = vector.shape_cast %52 : vector<1x8x8xf32> to vector<8x8xf32>
      %54 = vector.shape_cast %50 : vector<8x8xf32> to vector<1x8x8xf32>
      tpu.vector_store %arg17[%c1, %51, %c0_19], %54 {strides = array<i32>} : memref<4x16x8xf32, #tpu.memory_space<vmem>>, vector<1x8x8xf32>,
      %55 = vector.extract_strided_slice %37 {offsets = [0, 40], sizes = [8, 8], strides = [1, 1]} : vector<8x64xf32> to vector<8x8xf32>
      %c1_20 = arith.constant 1 : index
      %56 = arith.index_cast %39 : i32 to index
      %c0_21 = arith.constant 0 : index
      %57 = vector.load %arg18[%c1_20, %56, %c0_21] : memref<4x16x8xf32, #tpu.memory_space<vmem>>, vector<1x8x8xf32>
      %58 = vector.shape_cast %57 : vector<1x8x8xf32> to vector<8x8xf32>
      %59 = vector.shape_cast %55 : vector<8x8xf32> to vector<1x8x8xf32>
      tpu.vector_store %arg18[%c1_20, %56, %c0_21], %59 {strides = array<i32>} : memref<4x16x8xf32, #tpu.memory_space<vmem>>, vector<1x8x8xf32>,
      %60 = vector.extract_strided_slice %37 {offsets = [0, 16], sizes = [8, 8], strides = [1, 1]} : vector<8x64xf32> to vector<8x8xf32>
      %c2 = arith.constant 2 : index
      %61 = arith.index_cast %39 : i32 to index
      %c0_22 = arith.constant 0 : index
      %62 = vector.load %arg17[%c2, %61, %c0_22] : memref<4x16x8xf32, #tpu.memory_space<vmem>>, vector<1x8x8xf32>
      %63 = vector.shape_cast %62 : vector<1x8x8xf32> to vector<8x8xf32>
      %64 = vector.shape_cast %60 : vector<8x8xf32> to vector<1x8x8xf32>
      tpu.vector_store %arg17[%c2, %61, %c0_22], %64 {strides = array<i32>} : memref<4x16x8xf32, #tpu.memory_space<vmem>>, vector<1x8x8xf32>,
      %65 = vector.extract_strided_slice %37 {offsets = [0, 48], sizes = [8, 8], strides = [1, 1]} : vector<8x64xf32> to vector<8x8xf32>
      %c2_23 = arith.constant 2 : index
      %66 = arith.index_cast %39 : i32 to index
      %c0_24 = arith.constant 0 : index
      %67 = vector.load %arg18[%c2_23, %66, %c0_24] : memref<4x16x8xf32, #tpu.memory_space<vmem>>, vector<1x8x8xf32>
      %68 = vector.shape_cast %67 : vector<1x8x8xf32> to vector<8x8xf32>
      %69 = vector.shape_cast %65 : vector<8x8xf32> to vector<1x8x8xf32>
      tpu.vector_store %arg18[%c2_23, %66, %c0_24], %69 {strides = array<i32>} : memref<4x16x8xf32, #tpu.memory_space<vmem>>, vector<1x8x8xf32>,
      %70 = vector.extract_strided_slice %37 {offsets = [0, 24], sizes = [8, 8], strides = [1, 1]} : vector<8x64xf32> to vector<8x8xf32>
      %c3 = arith.constant 3 : index
      %71 = arith.index_cast %39 : i32 to index
      %c0_25 = arith.constant 0 : index
      %72 = vector.load %arg17[%c3, %71, %c0_25] : memref<4x16x8xf32, #tpu.memory_space<vmem>>, vector<1x8x8xf32>
      %73 = vector.shape_cast %72 : vector<1x8x8xf32> to vector<8x8xf32>
      %74 = vector.shape_cast %70 : vector<8x8xf32> to vector<1x8x8xf32>
      tpu.vector_store %arg17[%c3, %71, %c0_25], %74 {strides = array<i32>} : memref<4x16x8xf32, #tpu.memory_space<vmem>>, vector<1x8x8xf32>,
      %75 = vector.extract_strided_slice %37 {offsets = [0, 56], sizes = [8, 8], strides = [1, 1]} : vector<8x64xf32> to vector<8x8xf32>
      %c3_26 = arith.constant 3 : index
      %76 = arith.index_cast %39 : i32 to index
      %c0_27 = arith.constant 0 : index
      %77 = vector.load %arg18[%c3_26, %76, %c0_27] : memref<4x16x8xf32, #tpu.memory_space<vmem>>, vector<1x8x8xf32>
      %78 = vector.shape_cast %77 : vector<1x8x8xf32> to vector<8x8xf32>
      %79 = vector.shape_cast %75 : vector<8x8xf32> to vector<1x8x8xf32>
      tpu.vector_store %arg18[%c3_26, %76, %c0_27], %79 {strides = array<i32>} : memref<4x16x8xf32, #tpu.memory_space<vmem>>, vector<1x8x8xf32>,
    } else {
    }
    %c1_i32 = arith.constant 1 : i32
    %33 = arith.cmpi eq, %arg1, %c1_i32 : i32
    %34 = arith.extui %33 : i1 to i32
    %c0_i32_11 = arith.constant 0 : i32
    %35 = arith.cmpi ne, %34, %c0_i32_11 : i32
    scf.if %35 {
      %c0_12 = arith.constant 0 : index
      %c0_13 = arith.constant 0 : index
      %36 = vector.load %arg6[%c0_12, %c0_13] : memref<32x32xf32, #tpu.memory_space<vmem>>, vector<32x32xf32>
      %cst_14 = arith.constant dense<0.000000e+00> : vector<8x32xf32>
      %37 = tpu.matmul %29, %36, %cst_14 {dimension_numbers = #tpu.dot_dimension_numbers<[1], [0], [0], [1], [0, 0, 1, 1], [], []>} : vector<8x32xf32>, vector<32x32xf32>, vector<8x32xf32> -> vector<8x32xf32>
      %38 = vector.extract_strided_slice %37 {offsets = [0, 0], sizes = [8, 8], strides = [1, 1]} : vector<8x32xf32> to vector<8x8xf32>
      %c0_15 = arith.constant 0 : index
      %c0_16 = arith.constant 0 : index
      %c0_17 = arith.constant 0 : index
      %39 = vector.load %arg17[%c0_15, %c0_16, %c0_17] : memref<4x16x8xf32, #tpu.memory_space<vmem>>, vector<1x16x8xf32>
      %40 = vector.shape_cast %39 : vector<1x16x8xf32> to vector<16x8xf32>
      %cst_18 = arith.constant dense<0.000000e+00> : vector<8x16xf32>
      %41 = tpu.matmul %38, %40, %cst_18 {dimension_numbers = #tpu.dot_dimension_numbers<[1], [1], [0], [0], [0, 0, 1, 0], [], []>} : vector<8x8xf32>, vector<16x8xf32>, vector<8x16xf32> -> vector<8x16xf32>
      %cst_19 = arith.constant dense<0xFF800000> : vector<8xf32>
      %42 = vector.multi_reduction <maximumf>, %41, %cst_19 [1] : vector<8x16xf32> to vector<8xf32>
      %43 = vector.shape_cast %42 : vector<8xf32> to vector<8x1xf32>
      %44 = vector.broadcast %43 : vector<8x1xf32> to vector<8x16xf32>
      %45 = arith.subf %41, %44 : vector<8x16xf32>
      %46 = math.exp %45 : vector<8x16xf32>
      %cst_20 = arith.constant dense<0.000000e+00> : vector<8xf32>
      %47 = vector.multi_reduction <add>, %46, %cst_20 [1] : vector<8x16xf32> to vector<8xf32>
      %48 = vector.shape_cast %47 : vector<8xf32> to vector<8x1xf32>
      %c0_21 = arith.constant 0 : index
      %c0_22 = arith.constant 0 : index
      %c0_23 = arith.constant 0 : index
      %49 = vector.load %arg18[%c0_21, %c0_22, %c0_23] : memref<4x16x8xf32, #tpu.memory_space<vmem>>, vector<1x16x8xf32>
      %50 = vector.shape_cast %49 : vector<1x16x8xf32> to vector<16x8xf32>
      %cst_24 = arith.constant dense<0.000000e+00> : vector<8x8xf32>
      %51 = tpu.matmul %46, %50, %cst_24 {dimension_numbers = #tpu.dot_dimension_numbers<[1], [0], [0], [1], [0, 0, 1, 1], [], []>} : vector<8x16xf32>, vector<16x8xf32>, vector<8x8xf32> -> vector<8x8xf32>
      %52 = tpu.reciprocal %48 {approx = true} : vector<8x1xf32> -> vector<8x1xf32>
      %53 = vector.broadcast %52 : vector<8x1xf32> to vector<8x8xf32>
      %54 = arith.mulf %51, %53 : vector<8x8xf32>
      %c0_25 = arith.constant 0 : index
      %c0_26 = arith.constant 0 : index
      %55 = vector.load %arg19[%c0_25, %c0_26] : memref<8x32xf32, #tpu.memory_space<vmem>>, vector<8x8xf32>
      tpu.vector_store %arg19[%c0_25, %c0_26], %54 {strides = array<i32>} : memref<8x32xf32, #tpu.memory_space<vmem>>, vector<8x8xf32>,
      %56 = vector.extract_strided_slice %37 {offsets = [0, 8], sizes = [8, 8], strides = [1, 1]} : vector<8x32xf32> to vector<8x8xf32>
      %c1 = arith.constant 1 : index
      %c0_27 = arith.constant 0 : index
      %c0_28 = arith.constant 0 : index
      %57 = vector.load %arg17[%c1, %c0_27, %c0_28] : memref<4x16x8xf32, #tpu.memory_space<vmem>>, vector<1x16x8xf32>
      %58 = vector.shape_cast %57 : vector<1x16x8xf32> to vector<16x8xf32>
      %cst_29 = arith.constant dense<0.000000e+00> : vector<8x16xf32>
      %59 = tpu.matmul %56, %58, %cst_29 {dimension_numbers = #tpu.dot_dimension_numbers<[1], [1], [0], [0], [0, 0, 1, 0], [], []>} : vector<8x8xf32>, vector<16x8xf32>, vector<8x16xf32> -> vector<8x16xf32>
      %cst_30 = arith.constant dense<0xFF800000> : vector<8xf32>
      %60 = vector.multi_reduction <maximumf>, %59, %cst_30 [1] : vector<8x16xf32> to vector<8xf32>
      %61 = vector.shape_cast %60 : vector<8xf32> to vector<8x1xf32>
      %62 = vector.broadcast %61 : vector<8x1xf32> to vector<8x16xf32>
      %63 = arith.subf %59, %62 : vector<8x16xf32>
      %64 = math.exp %63 : vector<8x16xf32>
      %cst_31 = arith.constant dense<0.000000e+00> : vector<8xf32>
      %65 = vector.multi_reduction <add>, %64, %cst_31 [1] : vector<8x16xf32> to vector<8xf32>
      %66 = vector.shape_cast %65 : vector<8xf32> to vector<8x1xf32>
      %c1_32 = arith.constant 1 : index
      %c0_33 = arith.constant 0 : index
      %c0_34 = arith.constant 0 : index
      %67 = vector.load %arg18[%c1_32, %c0_33, %c0_34] : memref<4x16x8xf32, #tpu.memory_space<vmem>>, vector<1x16x8xf32>
      %68 = vector.shape_cast %67 : vector<1x16x8xf32> to vector<16x8xf32>
      %cst_35 = arith.constant dense<0.000000e+00> : vector<8x8xf32>
      %69 = tpu.matmul %64, %68, %cst_35 {dimension_numbers = #tpu.dot_dimension_numbers<[1], [0], [0], [1], [0, 0, 1, 1], [], []>} : vector<8x16xf32>, vector<16x8xf32>, vector<8x8xf32> -> vector<8x8xf32>
      %70 = tpu.reciprocal %66 {approx = true} : vector<8x1xf32> -> vector<8x1xf32>
      %71 = vector.broadcast %70 : vector<8x1xf32> to vector<8x8xf32>
      %72 = arith.mulf %69, %71 : vector<8x8xf32>
      %c0_36 = arith.constant 0 : index
      %c8 = arith.constant 8 : index
      %73 = vector.load %arg19[%c0_36, %c8] : memref<8x32xf32, #tpu.memory_space<vmem>>, vector<8x8xf32>
      tpu.vector_store %arg19[%c0_36, %c8], %72 {strides = array<i32>} : memref<8x32xf32, #tpu.memory_space<vmem>>, vector<8x8xf32>,
      %74 = vector.extract_strided_slice %37 {offsets = [0, 16], sizes = [8, 8], strides = [1, 1]} : vector<8x32xf32> to vector<8x8xf32>
      %c2 = arith.constant 2 : index
      %c0_37 = arith.constant 0 : index
      %c0_38 = arith.constant 0 : index
      %75 = vector.load %arg17[%c2, %c0_37, %c0_38] : memref<4x16x8xf32, #tpu.memory_space<vmem>>, vector<1x16x8xf32>
      %76 = vector.shape_cast %75 : vector<1x16x8xf32> to vector<16x8xf32>
      %cst_39 = arith.constant dense<0.000000e+00> : vector<8x16xf32>
      %77 = tpu.matmul %74, %76, %cst_39 {dimension_numbers = #tpu.dot_dimension_numbers<[1], [1], [0], [0], [0, 0, 1, 0], [], []>} : vector<8x8xf32>, vector<16x8xf32>, vector<8x16xf32> -> vector<8x16xf32>
      %cst_40 = arith.constant dense<0xFF800000> : vector<8xf32>
      %78 = vector.multi_reduction <maximumf>, %77, %cst_40 [1] : vector<8x16xf32> to vector<8xf32>
      %79 = vector.shape_cast %78 : vector<8xf32> to vector<8x1xf32>
      %80 = vector.broadcast %79 : vector<8x1xf32> to vector<8x16xf32>
      %81 = arith.subf %77, %80 : vector<8x16xf32>
      %82 = math.exp %81 : vector<8x16xf32>
      %cst_41 = arith.constant dense<0.000000e+00> : vector<8xf32>
      %83 = vector.multi_reduction <add>, %82, %cst_41 [1] : vector<8x16xf32> to vector<8xf32>
      %84 = vector.shape_cast %83 : vector<8xf32> to vector<8x1xf32>
      %c2_42 = arith.constant 2 : index
      %c0_43 = arith.constant 0 : index
      %c0_44 = arith.constant 0 : index
      %85 = vector.load %arg18[%c2_42, %c0_43, %c0_44] : memref<4x16x8xf32, #tpu.memory_space<vmem>>, vector<1x16x8xf32>
      %86 = vector.shape_cast %85 : vector<1x16x8xf32> to vector<16x8xf32>
      %cst_45 = arith.constant dense<0.000000e+00> : vector<8x8xf32>
      %87 = tpu.matmul %82, %86, %cst_45 {dimension_numbers = #tpu.dot_dimension_numbers<[1], [0], [0], [1], [0, 0, 1, 1], [], []>} : vector<8x16xf32>, vector<16x8xf32>, vector<8x8xf32> -> vector<8x8xf32>
      %88 = tpu.reciprocal %84 {approx = true} : vector<8x1xf32> -> vector<8x1xf32>
      %89 = vector.broadcast %88 : vector<8x1xf32> to vector<8x8xf32>
      %90 = arith.mulf %87, %89 : vector<8x8xf32>
      %c0_46 = arith.constant 0 : index
      %c16 = arith.constant 16 : index
      %91 = vector.load %arg19[%c0_46, %c16] : memref<8x32xf32, #tpu.memory_space<vmem>>, vector<8x8xf32>
      tpu.vector_store %arg19[%c0_46, %c16], %90 {strides = array<i32>} : memref<8x32xf32, #tpu.memory_space<vmem>>, vector<8x8xf32>,
      %92 = vector.extract_strided_slice %37 {offsets = [0, 24], sizes = [8, 8], strides = [1, 1]} : vector<8x32xf32> to vector<8x8xf32>
      %c3 = arith.constant 3 : index
      %c0_47 = arith.constant 0 : index
      %c0_48 = arith.constant 0 : index
      %93 = vector.load %arg17[%c3, %c0_47, %c0_48] : memref<4x16x8xf32, #tpu.memory_space<vmem>>, vector<1x16x8xf32>
      %94 = vector.shape_cast %93 : vector<1x16x8xf32> to vector<16x8xf32>
      %cst_49 = arith.constant dense<0.000000e+00> : vector<8x16xf32>
      %95 = tpu.matmul %92, %94, %cst_49 {dimension_numbers = #tpu.dot_dimension_numbers<[1], [1], [0], [0], [0, 0, 1, 0], [], []>} : vector<8x8xf32>, vector<16x8xf32>, vector<8x16xf32> -> vector<8x16xf32>
      %cst_50 = arith.constant dense<0xFF800000> : vector<8xf32>
      %96 = vector.multi_reduction <maximumf>, %95, %cst_50 [1] : vector<8x16xf32> to vector<8xf32>
      %97 = vector.shape_cast %96 : vector<8xf32> to vector<8x1xf32>
      %98 = vector.broadcast %97 : vector<8x1xf32> to vector<8x16xf32>
      %99 = arith.subf %95, %98 : vector<8x16xf32>
      %100 = math.exp %99 : vector<8x16xf32>
      %cst_51 = arith.constant dense<0.000000e+00> : vector<8xf32>
      %101 = vector.multi_reduction <add>, %100, %cst_51 [1] : vector<8x16xf32> to vector<8xf32>
      %102 = vector.shape_cast %101 : vector<8xf32> to vector<8x1xf32>
      %c3_52 = arith.constant 3 : index
      %c0_53 = arith.constant 0 : index
      %c0_54 = arith.constant 0 : index
      %103 = vector.load %arg18[%c3_52, %c0_53, %c0_54] : memref<4x16x8xf32, #tpu.memory_space<vmem>>, vector<1x16x8xf32>
      %104 = vector.shape_cast %103 : vector<1x16x8xf32> to vector<16x8xf32>
      %cst_55 = arith.constant dense<0.000000e+00> : vector<8x8xf32>
      %105 = tpu.matmul %100, %104, %cst_55 {dimension_numbers = #tpu.dot_dimension_numbers<[1], [0], [0], [1], [0, 0, 1, 1], [], []>} : vector<8x16xf32>, vector<16x8xf32>, vector<8x8xf32> -> vector<8x8xf32>
      %106 = tpu.reciprocal %102 {approx = true} : vector<8x1xf32> -> vector<8x1xf32>
      %107 = vector.broadcast %106 : vector<8x1xf32> to vector<8x8xf32>
      %108 = arith.mulf %105, %107 : vector<8x8xf32>
      %c0_56 = arith.constant 0 : index
      %c24 = arith.constant 24 : index
      %109 = vector.load %arg19[%c0_56, %c24] : memref<8x32xf32, #tpu.memory_space<vmem>>, vector<8x8xf32>
      tpu.vector_store %arg19[%c0_56, %c24], %108 {strides = array<i32>} : memref<8x32xf32, #tpu.memory_space<vmem>>, vector<8x8xf32>,
      %c0_57 = arith.constant 0 : index
      %c0_58 = arith.constant 0 : index
      %110 = vector.load %arg19[%c0_57, %c0_58] : memref<8x32xf32, #tpu.memory_space<vmem>>, vector<8x32xf32>
      %c0_59 = arith.constant 0 : index
      %c0_60 = arith.constant 0 : index
      %111 = vector.load %arg8[%c0_59, %c0_60] : memref<32x32xf32, #tpu.memory_space<vmem>>, vector<32x32xf32>
      %cst_61 = arith.constant dense<0.000000e+00> : vector<8x32xf32>
      %112 = tpu.matmul %110, %111, %cst_61 {dimension_numbers = #tpu.dot_dimension_numbers<[1], [0], [0], [1], [0, 0, 1, 1], [], []>} : vector<8x32xf32>, vector<32x32xf32>, vector<8x32xf32> -> vector<8x32xf32>
      %c0_62 = arith.constant 0 : index
      %c0_63 = arith.constant 0 : index
      %113 = vector.load %arg9[%c0_62, %c0_63] : memref<1x32xf32, #tpu.memory_space<vmem>>, vector<1x32xf32>
      %114 = vector.shape_cast %113 : vector<1x32xf32> to vector<32xf32>
      %115 = vector.shape_cast %114 : vector<32xf32> to vector<1x32xf32>
      %116 = vector.broadcast %115 : vector<1x32xf32> to vector<8x32xf32>
      %117 = arith.addf %112, %116 : vector<8x32xf32>
      %118 = arith.addf %5, %117 : vector<8x32xf32>
      %c0_64 = arith.constant 0 : index
      %c0_65 = arith.constant 0 : index
      %119 = vector.load %arg10[%c0_64, %c0_65] : memref<1x32xf32, #tpu.memory_space<vmem>>, vector<1x32xf32>
      %120 = vector.shape_cast %119 : vector<1x32xf32> to vector<32xf32>
      %c0_66 = arith.constant 0 : index
      %c0_67 = arith.constant 0 : index
      %121 = vector.load %arg11[%c0_66, %c0_67] : memref<1x32xf32, #tpu.memory_space<vmem>>, vector<1x32xf32>
      %122 = vector.shape_cast %121 : vector<1x32xf32> to vector<32xf32>
      %cst_68 = arith.constant dense<0.000000e+00> : vector<8xf32>
      %123 = vector.multi_reduction <add>, %118, %cst_68 [1] : vector<8x32xf32> to vector<8xf32>
      %124 = vector.shape_cast %123 : vector<8xf32> to vector<8x1xf32>
      %cst_69 = arith.constant 3.200000e+01 : f32
      %125 = vector.broadcast %cst_69 : f32 to vector<8x1xf32>
      %126 = arith.divf %124, %125 : vector<8x1xf32>
      %127 = vector.broadcast %126 : vector<8x1xf32> to vector<8x32xf32>
      %128 = arith.subf %118, %127 : vector<8x32xf32>
      %129 = arith.mulf %128, %128 : vector<8x32xf32>
      %cst_70 = arith.constant dense<0.000000e+00> : vector<8xf32>
      %130 = vector.multi_reduction <add>, %129, %cst_70 [1] : vector<8x32xf32> to vector<8xf32>
      %131 = vector.shape_cast %130 : vector<8xf32> to vector<8x1xf32>
      %cst_71 = arith.constant 3.200000e+01 : f32
      %132 = vector.broadcast %cst_71 : f32 to vector<8x1xf32>
      %133 = arith.divf %131, %132 : vector<8x1xf32>
      %134 = vector.broadcast %126 : vector<8x1xf32> to vector<8x32xf32>
      %135 = arith.subf %118, %134 : vector<8x32xf32>
      %cst_72 = arith.constant 9.99999974E-6 : f32
      %136 = vector.broadcast %cst_72 : f32 to vector<8x1xf32>
      %137 = arith.addf %133, %136 : vector<8x1xf32>
      %138 = math.rsqrt %137 : vector<8x1xf32>
      %139 = vector.broadcast %138 : vector<8x1xf32> to vector<8x32xf32>
      %140 = arith.mulf %135, %139 : vector<8x32xf32>
      %141 = vector.shape_cast %120 : vector<32xf32> to vector<1x32xf32>
      %142 = vector.broadcast %141 : vector<1x32xf32> to vector<8x32xf32>
      %143 = arith.mulf %140, %142 : vector<8x32xf32>
      %144 = vector.shape_cast %122 : vector<32xf32> to vector<1x32xf32>
      %145 = vector.broadcast %144 : vector<1x32xf32> to vector<8x32xf32>
      %146 = arith.addf %143, %145 : vector<8x32xf32>
      %c0_73 = arith.constant 0 : index
      %c0_74 = arith.constant 0 : index
      %147 = vector.load %arg12[%c0_73, %c0_74] : memref<32x128xf32, #tpu.memory_space<vmem>>, vector<32x128xf32>
      %cst_75 = arith.constant dense<0.000000e+00> : vector<8x128xf32>
      %148 = tpu.matmul %146, %147, %cst_75 {dimension_numbers = #tpu.dot_dimension_numbers<[1], [0], [0], [1], [0, 0, 1, 1], [], []>} : vector<8x32xf32>, vector<32x128xf32>, vector<8x128xf32> -> vector<8x128xf32>
      %c0_76 = arith.constant 0 : index
      %c0_77 = arith.constant 0 : index
      %149 = vector.load %arg13[%c0_76, %c0_77] : memref<1x128xf32, #tpu.memory_space<vmem>>, vector<1x128xf32>
      %150 = vector.shape_cast %149 : vector<1x128xf32> to vector<128xf32>
      %151 = vector.shape_cast %150 : vector<128xf32> to vector<1x128xf32>
      %152 = vector.broadcast %151 : vector<1x128xf32> to vector<8x128xf32>
      %153 = arith.addf %148, %152 : vector<8x128xf32>
      %cst_78 = arith.constant 0.000000e+00 : f32
      %154 = vector.broadcast %cst_78 : f32 to vector<8x128xf32>
      %155 = arith.cmpf oge, %153, %154 : vector<8x128xf32>
      %cst_79 = arith.constant 2.000000e-01 : f32
      %156 = vector.broadcast %cst_79 : f32 to vector<8x128xf32>
      %157 = arith.mulf %156, %153 : vector<8x128xf32>
      %158 = arith.select %155, %153, %157 : vector<8x128xi1>, vector<8x128xf32>
      %c0_80 = arith.constant 0 : index
      %c0_81 = arith.constant 0 : index
      %159 = vector.load %arg14[%c0_80, %c0_81] : memref<128x32xf32, #tpu.memory_space<vmem>>, vector<128x32xf32>
      %cst_82 = arith.constant dense<0.000000e+00> : vector<8x32xf32>
      %160 = tpu.matmul %158, %159, %cst_82 {dimension_numbers = #tpu.dot_dimension_numbers<[1], [0], [0], [1], [0, 0, 1, 1], [], []>} : vector<8x128xf32>, vector<128x32xf32>, vector<8x32xf32> -> vector<8x32xf32>
      %c0_83 = arith.constant 0 : index
      %c0_84 = arith.constant 0 : index
      %161 = vector.load %arg15[%c0_83, %c0_84] : memref<1x32xf32, #tpu.memory_space<vmem>>, vector<1x32xf32>
      %162 = vector.shape_cast %161 : vector<1x32xf32> to vector<32xf32>
      %163 = vector.shape_cast %162 : vector<32xf32> to vector<1x32xf32>
      %164 = vector.broadcast %163 : vector<1x32xf32> to vector<8x32xf32>
      %165 = arith.addf %160, %164 : vector<8x32xf32>
      %166 = arith.addf %118, %165 : vector<8x32xf32>
      %c0_85 = arith.constant 0 : index
      %c0_86 = arith.constant 0 : index
      %c0_87 = arith.constant 0 : index
      %167 = vector.load %arg16[%c0_85, %c0_86, %c0_87] : memref<1x8x32xf32, #tpu.memory_space<vmem>>, vector<1x8x32xf32>
      %168 = vector.shape_cast %167 : vector<1x8x32xf32> to vector<8x32xf32>
      %169 = vector.shape_cast %166 : vector<8x32xf32> to vector<1x8x32xf32>
      tpu.vector_store %arg16[%c0_85, %c0_86, %c0_87], %169 {strides = array<i32>} : memref<1x8x32xf32, #tpu.memory_space<vmem>>, vector<1x8x32xf32>,
    } else {
    }
    return
  }
  func.func @transform_0(%arg0: i32, %arg1: i32, %arg2: i32) -> (i32, i32, i32) {
    %c0_i32 = arith.constant 0 : i32
    %c0_i32_0 = arith.constant 0 : i32
    return %arg0, %arg2, %c0_i32 : i32, i32, i32
  }
  func.func @transform_1(%arg0: i32, %arg1: i32, %arg2: i32) -> (i32, i32) {
    %c0_i32 = arith.constant 0 : i32
    %c0_i32_0 = arith.constant 0 : i32
    %c0_i32_1 = arith.constant 0 : i32
    return %c0_i32, %c0_i32_0 : i32, i32
  }
  func.func @transform_2(%arg0: i32, %arg1: i32, %arg2: i32) -> (i32, i32) {
    %c0_i32 = arith.constant 0 : i32
    %c0_i32_0 = arith.constant 0 : i32
    %c0_i32_1 = arith.constant 0 : i32
    return %c0_i32, %c0_i32_0 : i32, i32
  }
  func.func @transform_3(%arg0: i32, %arg1: i32, %arg2: i32) -> (i32, i32) {
    %c0_i32 = arith.constant 0 : i32
    %c0_i32_0 = arith.constant 0 : i32
    %c0_i32_1 = arith.constant 0 : i32
    return %c0_i32, %c0_i32_0 : i32, i32
  }
  func.func @transform_4(%arg0: i32, %arg1: i32, %arg2: i32) -> (i32, i32) {
    %c0_i32 = arith.constant 0 : i32
    %c0_i32_0 = arith.constant 0 : i32
    %c0_i32_1 = arith.constant 0 : i32
    return %c0_i32, %c0_i32_0 : i32, i32
  }
  func.func @transform_5(%arg0: i32, %arg1: i32, %arg2: i32) -> (i32, i32) {
    %c0_i32 = arith.constant 0 : i32
    %c0_i32_0 = arith.constant 0 : i32
    %c0_i32_1 = arith.constant 0 : i32
    return %c0_i32, %c0_i32_0 : i32, i32
  }
  func.func @transform_6(%arg0: i32, %arg1: i32, %arg2: i32) -> (i32, i32) {
    %c0_i32 = arith.constant 0 : i32
    %c0_i32_0 = arith.constant 0 : i32
    %c0_i32_1 = arith.constant 0 : i32
    return %c0_i32, %c0_i32_0 : i32, i32
  }
  func.func @transform_7(%arg0: i32, %arg1: i32, %arg2: i32) -> (i32, i32) {
    %c0_i32 = arith.constant 0 : i32
    %c0_i32_0 = arith.constant 0 : i32
    %c0_i32_1 = arith.constant 0 : i32
    return %c0_i32, %c0_i32_0 : i32, i32
  }
  func.func @transform_8(%arg0: i32, %arg1: i32, %arg2: i32) -> (i32, i32) {
    %c0_i32 = arith.constant 0 : i32
    %c0_i32_0 = arith.constant 0 : i32
    %c0_i32_1 = arith.constant 0 : i32
    return %c0_i32, %c0_i32_0 : i32, i32
  }
  func.func @transform_9(%arg0: i32, %arg1: i32, %arg2: i32) -> (i32, i32) {
    %c0_i32 = arith.constant 0 : i32
    %c0_i32_0 = arith.constant 0 : i32
    %c0_i32_1 = arith.constant 0 : i32
    return %c0_i32, %c0_i32_0 : i32, i32
  }
  func.func @transform_10(%arg0: i32, %arg1: i32, %arg2: i32) -> (i32, i32) {
    %c0_i32 = arith.constant 0 : i32
    %c0_i32_0 = arith.constant 0 : i32
    %c0_i32_1 = arith.constant 0 : i32
    return %c0_i32, %c0_i32_0 : i32, i32
  }
  func.func @transform_11(%arg0: i32, %arg1: i32, %arg2: i32) -> (i32, i32) {
    %c0_i32 = arith.constant 0 : i32
    %c0_i32_0 = arith.constant 0 : i32
    %c0_i32_1 = arith.constant 0 : i32
    return %c0_i32, %c0_i32_0 : i32, i32
  }
  func.func @transform_12(%arg0: i32, %arg1: i32, %arg2: i32) -> (i32, i32) {
    %c0_i32 = arith.constant 0 : i32
    %c0_i32_0 = arith.constant 0 : i32
    %c0_i32_1 = arith.constant 0 : i32
    return %c0_i32, %c0_i32_0 : i32, i32
  }
  func.func @transform_13(%arg0: i32, %arg1: i32, %arg2: i32) -> (i32, i32, i32) {
    %0 = arith.muli %arg2, %arg1 : i32
    %c0_i32 = arith.constant 0 : i32
    %c0_i32_0 = arith.constant 0 : i32
    return %arg0, %0, %c0_i32 : i32, i32, i32
  }
}

</mosaic_0001>

<llo_original>
// kernel: tpu_custom_call.1
$region0: #{tpu_custom_call.1}
  #allocation0 [shape = 'u32[]', space=smem, size = 0x4, offset = 0x4, fixed_abs, tag = 'smem constant byte address 0x4 - core index']
  #allocation1 [shape = 'u32[72,128]{1,0:T(1,128)}', space=vmem, size = 0x9000, scoped, tag = 'internal scratch']
  #allocation2 [shape = 'f32[4,16,8]{2,1,0:T(8,128)}', space=vmem, size = 0x8000, scoped, tag = 'scratch operand']
  #allocation3 [shape = 'f32[4,16,8]{2,1,0:T(8,128)}', space=vmem, size = 0x8000, scoped, tag = 'scratch operand']
  #allocation4 [shape = 'f32[8,32]{1,0:T(8,128)}', space=vmem, size = 0x1000, scoped, tag = 'scratch operand']
  %s0 = inlined_call_operand.vmem [shape: f32[2,16,32], index: 0, kind: input, shape index: {}]
  %s1 = inlined_call_operand.hbm [shape: f32[1,32], index: 1, kind: input, shape index: {}]
  %s2 = inlined_call_operand.vmem [shape: f32[1,32], index: 2, kind: input, shape index: {}]
  %s3 = inlined_call_operand.vmem [shape: f32[32,32], index: 3, kind: input, shape index: {}]
  %s4 = inlined_call_operand.vmem [shape: f32[32,64], index: 4, kind: input, shape index: {}]
  %s5 = inlined_call_operand.vmem [shape: f32[32,32], index: 5, kind: input, shape index: {}]
  %s6 = inlined_call_operand.vmem [shape: f32[1,32], index: 6, kind: input, shape index: {}]
  %s7 = inlined_call_operand.vmem [shape: f32[1,32], index: 7, kind: input, shape index: {}]
  %s8 = inlined_call_operand.vmem [shape: f32[1,32], index: 8, kind: input, shape index: {}]
  %s9 = inlined_call_operand.vmem [shape: f32[32,128], index: 9, kind: input, shape index: {}]
  %s10 = inlined_call_operand.vmem [shape: f32[1,128], index: 10, kind: input, shape index: {}]
  %s11 = inlined_call_operand.vmem [shape: f32[128,32], index: 11, kind: input, shape index: {}]
  %s12 = inlined_call_operand.vmem [shape: f32[1,32], index: 12, kind: input, shape index: {}]
  %s13 = inlined_call_operand.hbm [shape: f32[2,16,32], index: 13, kind: output, shape index: {}]
  %s14 = sld [smem:[#allocation0]]
  $region97: #{tpu_custom_call.1} parent=0
    _
  %s16 = ssub.s32 1, %s14
  %s17 = scalar_select 0, %s16, %s14
  $region1: #{tpu_custom_call.1} parent=0
    #allocation5 [shape = 'u8[512]{0}', space=vmem, size = 0x400, scoped, tag = 'input window, operand 1, single buffered']
    #allocation6 [shape = 's32[2]{0}', space=sflag, size = 0x8, scoped, tag = 'scoped memory for tpu_custom_call.1']
    #allocation7 [shape = 's32[2]{0}', space=sflag, size = 0x8, scoped, tag = 'scoped memory for tpu_custom_call.1']
    #allocation8 [shape = 'u8[8192]{0}', space=vmem, size = 0x2000, scoped, tag = 'output window, operand 0']
    %18 = vsyncpa [#allocation6], 0
    %19 = vsyncpa [#allocation7], 0
    %s20 = scalar_lea.sflag [#allocation7], 1
    %21 = vsyncpa %s20, 0
    loop: start=0, step=1, limit=10
    $region2: #{tpu_custom_call.1} parent=1 // loop_pre_header
      _
    $region3: #{tpu_custom_call.1} parent=1 // loop_header
      %s23 = sphi 0, %s27
      %p24 = scmp.ge.s32.totalorder %s23, 10
      %s30 = sphi 0, %s49
      %s31 = sphi 0, %s45
      %s32 = sphi 0, %s41
      %s33 = sphi 0, %s30
      %s34 = sphi 0, %s31
      %s35 = sphi 0, %s32
      %s36 = sphi 0, %s33
      %s37 = sphi 0, %s34
      %s38 = sphi 0, %s35
      %s54 = sphi 0, %s56
      %s57 = sphi 0, %s54
      %s58 = sphi 0, %s57
      %s74 = sphi 0, %s58
      %s78 = sphi 0, %s78
      %s80 = sphi 0, %s78
      %s81 = sphi 0, %s80
      %s95 = sphi 0, %s81
      %s99 = sphi 0, %s99
      %s101 = sphi 0, %s99
      %s102 = sphi 0, %s101
      %s116 = sphi 0, %s102
      %s120 = sphi 0, %s120
      %s122 = sphi 0, %s120
      %s123 = sphi 0, %s122
      %s137 = sphi 0, %s123
      %s141 = sphi 0, %s141
      %s143 = sphi 0, %s141
      %s144 = sphi 0, %s143
      %s158 = sphi 0, %s144
      %s162 = sphi 0, %s162
      %s164 = sphi 0, %s162
      %s165 = sphi 0, %s164
      %s179 = sphi 0, %s165
      %s183 = sphi 0, %s183
      %s185 = sphi 0, %s183
      %s186 = sphi 0, %s185
      %s200 = sphi 0, %s186
      %s204 = sphi 0, %s204
      %s206 = sphi 0, %s204
      %s207 = sphi 0, %s206
      %s221 = sphi 0, %s207
      %s225 = sphi 0, %s225
      %s227 = sphi 0, %s225
      %s228 = sphi 0, %s227
      %s242 = sphi 0, %s228
      %s246 = sphi 0, %s246
      %s248 = sphi 0, %s246
      %s249 = sphi 0, %s248
      %s263 = sphi 0, %s249
      %s267 = sphi 0, %s267
      %s269 = sphi 0, %s267
      %s270 = sphi 0, %s269
      %s284 = sphi 0, %s270
      %s288 = sphi 0, %s288
      %s290 = sphi 0, %s288
      %s291 = sphi 0, %s290
      %s305 = sphi 0, %s291
      %s309 = sphi 0, %s309
      %s311 = sphi 0, %s309
      %s312 = sphi 0, %s311
      %s326 = sphi 0, %s312
      %s336 = sphi 0, %s338
      %s339 = sphi 0, %s336
      %s340 = sphi 0, %s339
      %s356 = sphi 0, %s340
    $region4: #{tpu_custom_call.1} parent=1 // loop_header_branch
      %26 = sbr.rel (%p24) target = $region8
    $region5: #{tpu_custom_call.1} parent=1 // loop_body
      %s28 = ssub.s32 %s23, 1
      %s29 = ssub.s32 %s23, 2
      %s39 = sadd.s32 1, %s32
      %p40 = scmp.ge.s32.totalorder %s39, 2
      %s41 = scalar_select %p40, 0, %s39
      %s42 = sadd.s32 1, %s31
      %s43 = scalar_select %p40, %s42, %s31
      %p44 = scmp.ge.s32.totalorder %s43, 2
      %s45 = scalar_select %p44, 0, %s43
      %s46 = sadd.s32 1, %s30
      %s47 = scalar_select %p44, %s46, %s30
      %p48 = scmp.ge.s32.totalorder %s47, 2
      %s49 = scalar_select %p48, 0, %s47
      %s50 = ssub.s32 %s30, %s49
      %s51 = ssub.s32 %s32, %s41
      %s52 = sor.u32 %s50, %s51
      %p53 = scmp.eq.s32.totalorder %s52, 0
      %s55 = sadd.s32 %s54, 1
      %s56 = scalar_select %p53, %s54, %s55
      %p59 = pneg %p53
      %p60 = scmp.eq.s32.totalorder %s23, 7
      %p61 = por %p59, %p60
      %p62 = scmp.ne.s32.totalorder %s54, %s57
      %p63 = scmp.eq.s32.totalorder %s23, 0
      %p64 = por %p62, %p63
      %p65 = scmp.ne.s32.totalorder %s54, %s57
      %p66 = scmp.eq.s32.totalorder %s28, 7
      %p67 = por %p65, %p66
      %p68 = scmp.ne.s32.totalorder %s57, %s58
      %p69 = scmp.eq.s32.totalorder %s28, 0
      %p70 = por %p68, %p69
      %p71 = scmp.ne.s32.totalorder %s57, %s58
      %p72 = scmp.eq.s32.totalorder %s29, 7
      %p73 = por %p71, %p72
      %p75 = scmp.ne.s32.totalorder %s58, %s74
      %p76 = scmp.eq.s32.totalorder %s29, 0
      %p77 = por %p75, %p76
      %s79 = sadd.s32 %s78, 1
      %p82 = scmp.eq.s32.totalorder %s23, 7
      %p83 = scmp.ne.s32.totalorder %s78, %s80
      %p84 = scmp.eq.s32.totalorder %s23, 0
      %p85 = por %p83, %p84
      %p86 = scmp.ne.s32.totalorder %s78, %s80
      %p87 = scmp.eq.s32.totalorder %s28, 7
      %p88 = por %p86, %p87
      %p89 = scmp.ne.s32.totalorder %s80, %s81
      %p90 = scmp.eq.s32.totalorder %s28, 0
      %p91 = por %p89, %p90
      %p92 = scmp.ne.s32.totalorder %s80, %s81
      %p93 = scmp.eq.s32.totalorder %s29, 7
      %p94 = por %p92, %p93
      %p96 = scmp.ne.s32.totalorder %s81, %s95
      %p97 = scmp.eq.s32.totalorder %s29, 0
      %p98 = por %p96, %p97
      %s100 = sadd.s32 %s99, 1
      %p103 = scmp.eq.s32.totalorder %s23, 7
      %p104 = scmp.ne.s32.totalorder %s99, %s101
      %p105 = scmp.eq.s32.totalorder %s23, 0
      %p106 = por %p104, %p105
      %p107 = scmp.ne.s32.totalorder %s99, %s101
      %p108 = scmp.eq.s32.totalorder %s28, 7
      %p109 = por %p107, %p108
      %p110 = scmp.ne.s32.totalorder %s101, %s102
      %p111 = scmp.eq.s32.totalorder %s28, 0
      %p112 = por %p110, %p111
      %p113 = scmp.ne.s32.totalorder %s101, %s102
      %p114 = scmp.eq.s32.totalorder %s29, 7
      %p115 = por %p113, %p114
      %p117 = scmp.ne.s32.totalorder %s102, %s116
      %p118 = scmp.eq.s32.totalorder %s29, 0
      %p119 = por %p117, %p118
      %s121 = sadd.s32 %s120, 1
      %p124 = scmp.eq.s32.totalorder %s23, 7
      %p125 = scmp.ne.s32.totalorder %s120, %s122
      %p126 = scmp.eq.s32.totalorder %s23, 0
      %p127 = por %p125, %p126
      %p128 = scmp.ne.s32.totalorder %s120, %s122
      %p129 = scmp.eq.s32.totalorder %s28, 7
      %p130 = por %p128, %p129
      %p131 = scmp.ne.s32.totalorder %s122, %s123
      %p132 = scmp.eq.s32.totalorder %s28, 0
      %p133 = por %p131, %p132
      %p134 = scmp.ne.s32.totalorder %s122, %s123
      %p135 = scmp.eq.s32.totalorder %s29, 7
      %p136 = por %p134, %p135
      %p138 = scmp.ne.s32.totalorder %s123, %s137
      %p139 = scmp.eq.s32.totalorder %s29, 0
      %p140 = por %p138, %p139
      %s142 = sadd.s32 %s141, 1
      %p145 = scmp.eq.s32.totalorder %s23, 7
      %p146 = scmp.ne.s32.totalorder %s141, %s143
      %p147 = scmp.eq.s32.totalorder %s23, 0
      %p148 = por %p146, %p147
      %p149 = scmp.ne.s32.totalorder %s141, %s143
      %p150 = scmp.eq.s32.totalorder %s28, 7
      %p151 = por %p149, %p150
      %p152 = scmp.ne.s32.totalorder %s143, %s144
      %p153 = scmp.eq.s32.totalorder %s28, 0
      %p154 = por %p152, %p153
      %p155 = scmp.ne.s32.totalorder %s143, %s144
      %p156 = scmp.eq.s32.totalorder %s29, 7
      %p157 = por %p155, %p156
      %p159 = scmp.ne.s32.totalorder %s144, %s158
      %p160 = scmp.eq.s32.totalorder %s29, 0
      %p161 = por %p159, %p160
      %s163 = sadd.s32 %s162, 1
      %p166 = scmp.eq.s32.totalorder %s23, 7
      %p167 = scmp.ne.s32.totalorder %s162, %s164
      %p168 = scmp.eq.s32.totalorder %s23, 0
      %p169 = por %p167, %p168
      %p170 = scmp.ne.s32.totalorder %s162, %s164
      %p171 = scmp.eq.s32.totalorder %s28, 7
      %p172 = por %p170, %p171
      %p173 = scmp.ne.s32.totalorder %s164, %s165
      %p174 = scmp.eq.s32.totalorder %s28, 0
      %p175 = por %p173, %p174
      %p176 = scmp.ne.s32.totalorder %s164, %s165
      %p177 = scmp.eq.s32.totalorder %s29, 7
      %p178 = por %p176, %p177
      %p180 = scmp.ne.s32.totalorder %s165, %s179
      %p181 = scmp.eq.s32.totalorder %s29, 0
      %p182 = por %p180, %p181
      %s184 = sadd.s32 %s183, 1
      %p187 = scmp.eq.s32.totalorder %s23, 7
      %p188 = scmp.ne.s32.totalorder %s183, %s185
      %p189 = scmp.eq.s32.totalorder %s23, 0
      %p190 = por %p188, %p189
      %p191 = scmp.ne.s32.totalorder %s183, %s185
      %p192 = scmp.eq.s32.totalorder %s28, 7
      %p193 = por %p191, %p192
      %p194 = scmp.ne.s32.totalorder %s185, %s186
      %p195 = scmp.eq.s32.totalorder %s28, 0
      %p196 = por %p194, %p195
      %p197 = scmp.ne.s32.totalorder %s185, %s186
      %p198 = scmp.eq.s32.totalorder %s29, 7
      %p199 = por %p197, %p198
      %p201 = scmp.ne.s32.totalorder %s186, %s200
      %p202 = scmp.eq.s32.totalorder %s29, 0
      %p203 = por %p201, %p202
      %s205 = sadd.s32 %s204, 1
      %p208 = scmp.eq.s32.totalorder %s23, 7
      %p209 = scmp.ne.s32.totalorder %s204, %s206
      %p210 = scmp.eq.s32.totalorder %s23, 0
      %p211 = por %p209, %p210
      %p212 = scmp.ne.s32.totalorder %s204, %s206
      %p213 = scmp.eq.s32.totalorder %s28, 7
      %p214 = por %p212, %p213
      %p215 = scmp.ne.s32.totalorder %s206, %s207
      %p216 = scmp.eq.s32.totalorder %s28, 0
      %p217 = por %p215, %p216
      %p218 = scmp.ne.s32.totalorder %s206, %s207
      %p219 = scmp.eq.s32.totalorder %s29, 7
      %p220 = por %p218, %p219
      %p222 = scmp.ne.s32.totalorder %s207, %s221
      %p223 = scmp.eq.s32.totalorder %s29, 0
      %p224 = por %p222, %p223
      %s226 = sadd.s32 %s225, 1
      %p229 = scmp.eq.s32.totalorder %s23, 7
      %p230 = scmp.ne.s32.totalorder %s225, %s227
      %p231 = scmp.eq.s32.totalorder %s23, 0
      %p232 = por %p230, %p231
      %p233 = scmp.ne.s32.totalorder %s225, %s227
      %p234 = scmp.eq.s32.totalorder %s28, 7
      %p235 = por %p233, %p234
      %p236 = scmp.ne.s32.totalorder %s227, %s228
      %p237 = scmp.eq.s32.totalorder %s28, 0
      %p238 = por %p236, %p237
      %p239 = scmp.ne.s32.totalorder %s227, %s228
      %p240 = scmp.eq.s32.totalorder %s29, 7
      %p241 = por %p239, %p240
      %p243 = scmp.ne.s32.totalorder %s228, %s242
      %p244 = scmp.eq.s32.totalorder %s29, 0
      %p245 = por %p243, %p244
      %s247 = sadd.s32 %s246, 1
      %p250 = scmp.eq.s32.totalorder %s23, 7
      %p251 = scmp.ne.s32.totalorder %s246, %s248
      %p252 = scmp.eq.s32.totalorder %s23, 0
      %p253 = por %p251, %p252
      %p254 = scmp.ne.s32.totalorder %s246, %s248
      %p255 = scmp.eq.s32.totalorder %s28, 7
      %p256 = por %p254, %p255
      %p257 = scmp.ne.s32.totalorder %s248, %s249
      %p258 = scmp.eq.s32.totalorder %s28, 0
      %p259 = por %p257, %p258
      %p260 = scmp.ne.s32.totalorder %s248, %s249
      %p261 = scmp.eq.s32.totalorder %s29, 7
      %p262 = por %p260, %p261
      %p264 = scmp.ne.s32.totalorder %s249, %s263
      %p265 = scmp.eq.s32.totalorder %s29, 0
      %p266 = por %p264, %p265
      %s268 = sadd.s32 %s267, 1
      %p271 = scmp.eq.s32.totalorder %s23, 7
      %p272 = scmp.ne.s32.totalorder %s267, %s269
      %p273 = scmp.eq.s32.totalorder %s23, 0
      %p274 = por %p272, %p273
      %p275 = scmp.ne.s32.totalorder %s267, %s269
      %p276 = scmp.eq.s32.totalorder %s28, 7
      %p277 = por %p275, %p276
      %p278 = scmp.ne.s32.totalorder %s269, %s270
      %p279 = scmp.eq.s32.totalorder %s28, 0
      %p280 = por %p278, %p279
      %p281 = scmp.ne.s32.totalorder %s269, %s270
      %p282 = scmp.eq.s32.totalorder %s29, 7
      %p283 = por %p281, %p282
      %p285 = scmp.ne.s32.totalorder %s270, %s284
      %p286 = scmp.eq.s32.totalorder %s29, 0
      %p287 = por %p285, %p286
      %s289 = sadd.s32 %s288, 1
      %p292 = scmp.eq.s32.totalorder %s23, 7
      %p293 = scmp.ne.s32.totalorder %s288, %s290
      %p294 = scmp.eq.s32.totalorder %s23, 0
      %p295 = por %p293, %p294
      %p296 = scmp.ne.s32.totalorder %s288, %s290
      %p297 = scmp.eq.s32.totalorder %s28, 7
      %p298 = por %p296, %p297
      %p299 = scmp.ne.s32.totalorder %s290, %s291
      %p300 = scmp.eq.s32.totalorder %s28, 0
      %p301 = por %p299, %p300
      %p302 = scmp.ne.s32.totalorder %s290, %s291
      %p303 = scmp.eq.s32.totalorder %s29, 7
      %p304 = por %p302, %p303
      %p306 = scmp.ne.s32.totalorder %s291, %s305
      %p307 = scmp.eq.s32.totalorder %s29, 0
      %p308 = por %p306, %p307
      %s310 = sadd.s32 %s309, 1
      %p313 = scmp.eq.s32.totalorder %s23, 7
      %p314 = scmp.ne.s32.totalorder %s309, %s311
      %p315 = scmp.eq.s32.totalorder %s23, 0
      %p316 = por %p314, %p315
      %p317 = scmp.ne.s32.totalorder %s309, %s311
      %p318 = scmp.eq.s32.totalorder %s28, 7
      %p319 = por %p317, %p318
      %p320 = scmp.ne.s32.totalorder %s311, %s312
      %p321 = scmp.eq.s32.totalorder %s28, 0
      %p322 = por %p320, %p321
      %p323 = scmp.ne.s32.totalorder %s311, %s312
      %p324 = scmp.eq.s32.totalorder %s29, 7
      %p325 = por %p323, %p324
      %p327 = scmp.ne.s32.totalorder %s312, %s326
      %p328 = scmp.eq.s32.totalorder %s29, 0
      %p329 = por %p327, %p328
      %s330 = smul.u32 %s32, %s31
      %s331 = smul.u32 %s41, %s45
      %s332 = ssub.s32 %s30, %s49
      %s333 = ssub.s32 %s330, %s331
      %s334 = sor.u32 %s332, %s333
      %p335 = scmp.eq.s32.totalorder %s334, 0
      %s337 = sadd.s32 %s336, 1
      %s338 = scalar_select %p335, %s336, %s337
      %p341 = pneg %p335
      %p342 = scmp.eq.s32.totalorder %s23, 7
      %p343 = por %p341, %p342
      %p344 = scmp.ne.s32.totalorder %s336, %s339
      %p345 = scmp.eq.s32.totalorder %s23, 0
      %p346 = por %p344, %p345
      %p347 = scmp.ne.s32.totalorder %s336, %s339
      %p348 = scmp.eq.s32.totalorder %s28, 7
      %p349 = por %p347, %p348
      %p350 = scmp.ne.s32.totalorder %s339, %s340
      %p351 = scmp.eq.s32.totalorder %s28, 0
      %p352 = por %p350, %p351
      %p353 = scmp.ne.s32.totalorder %s339, %s340
      %p354 = scmp.eq.s32.totalorder %s29, 7
      %p355 = por %p353, %p354
      %p357 = scmp.ne.s32.totalorder %s340, %s356
      %p358 = scmp.eq.s32.totalorder %s29, 0
      %p359 = por %p357, %p358
      %p360 = scmp.le.s32.totalorder 1, %s23
      %p361 = scmp.lt.s32.totalorder %s23, 9
      %p362 = pnand %p360, %p361
      %p363 = pneg %p362
      // Predicated region
      $region9: #{tpu_custom_call.1} parent=5 // pred_check
        _
      $region10: #{tpu_custom_call.1} parent=5 // pred_check_branch
        %365 = sbr.rel (%p362) target = $region12
      $region11: #{tpu_custom_call.1} parent=5 // pred_region
        %s366 = ssub.s32 %s23, 1
        // Predicated region
        $region13: #{tpu_custom_call.1} parent=11 // pred_check
          %p367 = pneg %p91
        $region14: #{tpu_custom_call.1} parent=11 // pred_check_branch
          %369 = sbr.rel (%p367) target = $region16
        $region15: #{tpu_custom_call.1} parent=11 // pred_region
          %371 = vsyncadd [#allocation6], 0
          %s373 = sshll.u32 %s1, 4
          %s374 = int_to_ptr.hbm [resolvable:$true] %s373
          %s375 = sshll.u32 [#allocation5], 4
          %s376 = int_to_ptr.vmem [resolvable:$true] %s375
          %378 = dma.hbm_to_vmem [thread:$0]  %s374, 16, %s376, [#allocation6]
        $region16: #{tpu_custom_call.1} parent=11 // pred_fallthru
          _
        // Predicated region
        $region17: #{tpu_custom_call.1} parent=11 // pred_check
          %p379 = pneg %p112
        $region18: #{tpu_custom_call.1} parent=11 // pred_check_branch
          %381 = sbr.rel (%p379) target = $region20
        $region19: #{tpu_custom_call.1} parent=11 // pred_region
          _
        $region20: #{tpu_custom_call.1} parent=11 // pred_fallthru
          _
        // Predicated region
        $region21: #{tpu_custom_call.1} parent=11 // pred_check
          %p382 = pneg %p133
        $region22: #{tpu_custom_call.1} parent=11 // pred_check_branch
          %384 = sbr.rel (%p382) target = $region24
        $region23: #{tpu_custom_call.1} parent=11 // pred_region
          _
        $region24: #{tpu_custom_call.1} parent=11 // pred_fallthru
          _
        // Predicated region
        $region25: #{tpu_custom_call.1} parent=11 // pred_check
          %p385 = pneg %p154
        $region26: #{tpu_custom_call.1} parent=11 // pred_check_branch
          %387 = sbr.rel (%p385) target = $region28
        $region27: #{tpu_custom_call.1} parent=11 // pred_region
          _
        $region28: #{tpu_custom_call.1} parent=11 // pred_fallthru
          _
        // Predicated region
        $region29: #{tpu_custom_call.1} parent=11 // pred_check
          %p388 = pneg %p175
        $region30: #{tpu_custom_call.1} parent=11 // pred_check_branch
          %390 = sbr.rel (%p388) target = $region32
        $region31: #{tpu_custom_call.1} parent=11 // pred_region
          _
        $region32: #{tpu_custom_call.1} parent=11 // pred_fallthru
          _
        // Predicated region
        $region33: #{tpu_custom_call.1} parent=11 // pred_check
          %p391 = pneg %p196
        $region34: #{tpu_custom_call.1} parent=11 // pred_check_branch
          %393 = sbr.rel (%p391) target = $region36
        $region35: #{tpu_custom_call.1} parent=11 // pred_region
          _
        $region36: #{tpu_custom_call.1} parent=11 // pred_fallthru
          _
        // Predicated region
        $region37: #{tpu_custom_call.1} parent=11 // pred_check
          %p394 = pneg %p217
        $region38: #{tpu_custom_call.1} parent=11 // pred_check_branch
          %396 = sbr.rel (%p394) target = $region40
        $region39: #{tpu_custom_call.1} parent=11 // pred_region
          _
        $region40: #{tpu_custom_call.1} parent=11 // pred_fallthru
          _
        // Predicated region
        $region41: #{tpu_custom_call.1} parent=11 // pred_check
          %p397 = pneg %p238
        $region42: #{tpu_custom_call.1} parent=11 // pred_check_branch
          %399 = sbr.rel (%p397) target = $region44
        $region43: #{tpu_custom_call.1} parent=11 // pred_region
          _
        $region44: #{tpu_custom_call.1} parent=11 // pred_fallthru
          _
        // Predicated region
        $region45: #{tpu_custom_call.1} parent=11 // pred_check
          %p400 = pneg %p259
        $region46: #{tpu_custom_call.1} parent=11 // pred_check_branch
          %402 = sbr.rel (%p400) target = $region48
        $region47: #{tpu_custom_call.1} parent=11 // pred_region
          _
        $region48: #{tpu_custom_call.1} parent=11 // pred_fallthru
          _
        // Predicated region
        $region49: #{tpu_custom_call.1} parent=11 // pred_check
          %p403 = pneg %p280
        $region50: #{tpu_custom_call.1} parent=11 // pred_check_branch
          %405 = sbr.rel (%p403) target = $region52
        $region51: #{tpu_custom_call.1} parent=11 // pred_region
          _
        $region52: #{tpu_custom_call.1} parent=11 // pred_fallthru
          _
        // Predicated region
        $region53: #{tpu_custom_call.1} parent=11 // pred_check
          %p406 = pneg %p301
        $region54: #{tpu_custom_call.1} parent=11 // pred_check_branch
          %408 = sbr.rel (%p406) target = $region56
        $region55: #{tpu_custom_call.1} parent=11 // pred_region
          _
        $region56: #{tpu_custom_call.1} parent=11 // pred_fallthru
          _
        // Predicated region
        $region57: #{tpu_custom_call.1} parent=11 // pred_check
          %p409 = pneg %p322
        $region58: #{tpu_custom_call.1} parent=11 // pred_check_branch
          %411 = sbr.rel (%p409) target = $region60
        $region59: #{tpu_custom_call.1} parent=11 // pred_region
          _
        $region60: #{tpu_custom_call.1} parent=11 // pred_fallthru
          _
      $region12: #{tpu_custom_call.1} parent=5 // pred_fallthru
        _
      %p412 = scmp.lt.s32.totalorder %s23, 8
      // Predicated region
      $region61: #{tpu_custom_call.1} parent=5 // pred_check
        %p413 = pneg %p412
      $region62: #{tpu_custom_call.1} parent=5 // pred_check_branch
        %415 = sbr.rel (%p413) target = $region64
      $region63: #{tpu_custom_call.1} parent=5 // pred_region
        // Predicated region
        $region65: #{tpu_custom_call.1} parent=63 // pred_check
          %p416 = pneg %p64
        $region66: #{tpu_custom_call.1} parent=63 // pred_check_branch
          %418 = sbr.rel (%p416) target = $region68
        $region67: #{tpu_custom_call.1} parent=63 // pred_region
          %p419 = scmp.lt.s32.totalorder %s30, 1
          %s420 = scalar_select %p419, %s30, 1
          %p421 = scmp.lt.s32.totalorder %s32, 1
          %s422 = scalar_select %p421, %s32, 1
          %s423 = smul.addr %s420, 2
          %s424 = sadd.s32 %s422, %s423
          %s425 = smul.addr %s424, 8
          %s426 = scalar_lea.vmem %s0, %s425
        $region68: #{tpu_custom_call.1} parent=63 // pred_fallthru
          _
      $region64: #{tpu_custom_call.1} parent=5 // pred_fallthru
        _
      %p427 = scmp.le.s32.totalorder 1, %s23
      %p428 = scmp.lt.s32.totalorder %s23, 9
      %p429 = pnand %p427, %p428
      %p430 = pneg %p429
      // Predicated region
      $region69: #{tpu_custom_call.1} parent=5 // pred_check
        _
      $region70: #{tpu_custom_call.1} parent=5 // pred_check_branch
        %432 = sbr.rel (%p429) target = $region72
      $region71: #{tpu_custom_call.1} parent=5 // pred_region
        %s433 = ssub.s32 %s23, 1
        // Predicated region
        $region73: #{tpu_custom_call.1} parent=71 // pred_check
          %p434 = pneg %p91
        $region74: #{tpu_custom_call.1} parent=71 // pred_check_branch
          %436 = sbr.rel (%p434) target = $region76
        $region75: #{tpu_custom_call.1} parent=71 // pred_region
          %438 = dma.done [#allocation6], 16
        $region76: #{tpu_custom_call.1} parent=71 // pred_fallthru
          _
        %p439 = scmp.lt.s32.totalorder %s33, 1
        %s440 = scalar_select %p439, %s33, 1
        %p441 = scmp.lt.s32.totalorder %s35, 1
        %s442 = scalar_select %p441, %s35, 1
        %s443 = smul.addr %s440, 2
        %s444 = sadd.s32 %s442, %s443
        %s445 = smul.addr %s444, 8
        %s446 = scalar_lea.vmem %s0, %s445
        %p447 = pneg %p70
        %p448 = pneg %p67
        %p449 = pneg %p91
        %p450 = pneg %p88
        %p451 = pneg %p112
        %p452 = pneg %p109
        %p453 = pneg %p133
        %p454 = pneg %p130
        %p455 = pneg %p154
        %p456 = pneg %p151
        %p457 = pneg %p175
        %p458 = pneg %p172
        %p459 = pneg %p196
        %p460 = pneg %p193
        %p461 = pneg %p217
        %p462 = pneg %p214
        %p463 = pneg %p238
        %p464 = pneg %p235
        %p465 = pneg %p259
        %p466 = pneg %p256
        %p467 = pneg %p280
        %p468 = pneg %p277
        %p469 = pneg %p301
        %p470 = pneg %p298
        %p471 = pneg %p322
        %p472 = pneg %p319
        %p473 = pneg %p352
        %p474 = pneg %p349
        %s475 = sand.u32 %s339, 1
        %s476 = scalar_lea.sflag [#allocation7], %s475
        %s477 = sand.u32 %s339, 1
        %s478 = smul.addr %s477, 8
        %s479 = scalar_lea.vmem [#allocation8], %s478
        %p480 = scmp.lt.s32.totalorder %s33, 1
        %s481 = scalar_select %p480, %s33, 1
        %p482 = scmp.lt.s32.totalorder %s35, 1
        %s483 = scalar_select %p482, %s35, 1
        %s484 = smul.addr %s481, 2
        %s485 = sadd.s32 %s483, %s484
        %s486 = smul.addr %s485, 8
        %s487 = scalar_lea.vmem %s0, %s486
        %s488 = smul.u32 %s35, %s34
        %v489 = vld [vmem:[#allocation5] sm:$0x1]
        %v490 = vld [vmem:[%s2] sm:$0x1]
        %v491 = vld [vmem:[%s487] sm:$0xff]
        %vm492 = vcmask 261120
        %v493 = vsel %vm492, %v491, 0.0
        %494 = vadd.xlane.f32.xlu0 %v493
        %v495 = vpop.xlane.xlu0 %494
        %v496 = vrcp.pop 32.0
        %v497 = vmul.f32 32.0, %v496
        %v498 = vsub.f32 1.0, %v497
        %v499 = vmul.f32 %v496, %v498
        %v500 = vadd.f32 %v496, %v499
        %vm501 = vweird.f32 %v496
        %v502 = vsel %vm501, %v496, %v500
        %v503 = vmul.f32 %v495, %v502
        %v504 = vsub.f32 %v491, %v503
        %v505 = vmul.f32 %v504, %v504
        %v506 = vsel %vm492, %v505, 0.0
        %507 = vadd.xlane.f32.xlu0 %v506
        %v508 = vpop.xlane.xlu0 %507
        %v509 = vmul.f32 %v508, %v502
        %v510 = vadd.f32 %v509, 1e-05
        %v511 = vrsqrt.pop %v510
        %v512 = vmul.f32 %v511, %v510
        %v513 = vmul.f32 %v512, %v511
        %v514 = vmul.f32 0.5, %v513
        %v515 = vsub.f32 1.5, %v514
        %v516 = vmul.f32 %v511, %v515
        %vm517 = vweird.f32 %v510
        %vm518 = vweird.f32 %v511
        %vm519 = vmor %vm517, %vm518
        %v520 = vsel %vm519, %v511, %v516
        %v521 = vmul.f32 %v504, %v520
        %v523 = vperm.slane %v489, 0
        %v525 = vmul.f32 %v521, %v523
        %v527 = vperm.slane %v490, 0
        %v529 = vadd.f32 %v525, %v527
        %p530 = scmp.eq.s32.totalorder %s34, 0
        // Predicated region
        $region77: #{tpu_custom_call.1} parent=71 // pred_check
          %p531 = pneg %p530
        $region78: #{tpu_custom_call.1} parent=71 // pred_check_branch
          %533 = sbr.rel (%p531) target = $region80
        $region79: #{tpu_custom_call.1} parent=71 // pred_region
          %v534 = vld [vmem:[%s4] sm:$0xff]
          %v535 = vld [vmem:[%s4 + $0x8] sm:$0xff]
          %v536 = vld [vmem:[%s4 + $0x10] sm:$0xff]
          %v537 = vld [vmem:[%s4 + $0x18] sm:$0xff]
          %v539 = vsel %vm492, %v529, 0
          %541 = vmatpush.msra.mxu0 0.0
          %542 = vmatpush.msra.mxu0 0.0
          %543 = vmatpush.msra.mxu0 0.0
          %544 = vmatpush.msra.mxu0 0.0
          %545 = vmatpush.msra.mxu0 0.0
          %546 = vmatpush.msra.mxu0 0.0
          %547 = vmatpush.msra.mxu0 0.0
          %548 = vmatpush.msra.mxu0 0.0
          %549 = vmatpush.msra.mxu0 0.0
          %550 = vmatpush.msra.mxu0 0.0
          %551 = vmatpush.msra.mxu0 0.0
          %552 = vmatpush.msra.mxu0 0.0
          %553 = vmatpush.msra.mxu0 %v537
          %554 = vmatpush.msra.mxu0 %v536
          %555 = vmatpush.msra.mxu0 %v535
          %556 = vmatpush.msra.mxu0 %v534
          %557 = vmatmul.f32.gmra.mxu0 %v539
          %v558 = vpop.f32.mrf.mxu0
          %v559 = vadd.f32 0.0, %v558
          %560 = vdwg.mxu0
          %s561 = smul.u32 %s35, 8
          %s562 = scalar_lea.vmem [#allocation2], %s561
          %vm563 = vcmask 64512
          %564 = vst.msk [vmem:[%s562] sm:$0xff] %vm563, %v559
          %566 = vrot.lane.b32.xlu0 %v559, 96
          %v567 = vpop.permute.xlu0 %566
          %s569 = scalar_lea.vmem [#allocation3], %s561
          %570 = vst.msk [vmem:[%s569] sm:$0xff] %vm563, %v567
          %571 = vrot.lane.b32.xlu0 %v559, 120
          %v572 = vpop.permute.xlu0 %571
          %s574 = sadd.s32 %s561, 16
          %s575 = scalar_lea.vmem [#allocation2], %s574
          %576 = vst.msk [vmem:[%s575] sm:$0xff] %vm563, %v572
          %577 = vrot.lane.b32.xlu0 %v559, 88
          %v578 = vpop.permute.xlu0 %577
          %s580 = scalar_lea.vmem [#allocation3], %s574
          %581 = vst.msk [vmem:[%s580] sm:$0xff] %vm563, %v578
          %582 = vrot.lane.b32.xlu0 %v559, 112
          %v583 = vpop.permute.xlu0 %582
          %s585 = sadd.s32 %s561, 32
          %s586 = scalar_lea.vmem [#allocation2], %s585
          %587 = vst.msk [vmem:[%s586] sm:$0xff] %vm563, %v583
          %588 = vrot.lane.b32.xlu0 %v559, 80
          %v589 = vpop.permute.xlu0 %588
          %s591 = scalar_lea.vmem [#allocation3], %s585
          %592 = vst.msk [vmem:[%s591] sm:$0xff] %vm563, %v589
          %593 = vrot.lane.b32.xlu0 %v559, 104
          %v594 = vpop.permute.xlu0 %593
          %s596 = sadd.s32 %s561, 48
          %s597 = scalar_lea.vmem [#allocation2], %s596
          %598 = vst.msk [vmem:[%s597] sm:$0xff] %vm563, %v594
          %599 = vrot.lane.b32.xlu0 %v559, 72
          %v600 = vpop.permute.xlu0 %599
          %s602 = scalar_lea.vmem [#allocation3], %s596
          %603 = vst.msk [vmem:[%s602] sm:$0xff] %vm563, %v600
        $region80: #{tpu_custom_call.1} parent=71 // pred_fallthru
          _
        %p604 = scmp.eq.s32.totalorder %s34, 1
        // Predicated region
        $region81: #{tpu_custom_call.1} parent=71 // pred_check
          %p605 = pneg %p604
        $region82: #{tpu_custom_call.1} parent=71 // pred_check_branch
          %607 = sbr.rel (%p605) target = $region84
        $region83: #{tpu_custom_call.1} parent=71 // pred_region
          %v608 = vld [vmem:[%s3] sm:$0xff]
          %v609 = vld [vmem:[%s3 + $0x8] sm:$0xff]
          %v610 = vld [vmem:[%s3 + $0x10] sm:$0xff]
          %v611 = vld [vmem:[%s3 + $0x18] sm:$0xff]
          %v613 = vsel %vm492, %v529, 0
          %615 = vmatpush.msra.mxu0 0.0
          %616 = vmatpush.msra.mxu0 0.0
          %617 = vmatpush.msra.mxu0 0.0
          %618 = vmatpush.msra.mxu0 0.0
          %619 = vmatpush.msra.mxu0 0.0
          %620 = vmatpush.msra.mxu0 0.0
          %621 = vmatpush.msra.mxu0 0.0
          %622 = vmatpush.msra.mxu0 0.0
          %623 = vmatpush.msra.mxu0 0.0
          %624 = vmatpush.msra.mxu0 0.0
          %625 = vmatpush.msra.mxu0 0.0
          %626 = vmatpush.msra.mxu0 0.0
          %627 = vmatpush.msra.mxu0 %v611
          %628 = vmatpush.msra.mxu0 %v610
          %629 = vmatpush.msra.mxu0 %v609
          %630 = vmatpush.msra.mxu0 %v608
          %631 = vmatmul.f32.gmra.mxu0 %v613
          %v632 = vpop.f32.mrf.mxu0
          %v633 = vadd.f32 0.0, %v632
          %634 = vdwg.mxu0
          %v635 = vld [vmem:[#allocation2] sm:$0xff]
          %v636 = vld [vmem:[#allocation2 + $0x8] sm:$0xff]
          %vm637 = vcmask 64512
          %v639 = vsel %vm637, %v633, 0
          %v642 = vsel %vm637, %v635, 0
          %v645 = vsel %vm637, %v636, 0
          %647 = vmatpush.xpose.msra.mxu0 0.0
          %648 = vmatpush.xpose.msra.mxu0 0.0
          %649 = vmatpush.xpose.msra.mxu0 0.0
          %650 = vmatpush.xpose.msra.mxu0 0.0
          %651 = vmatpush.xpose.msra.mxu0 0.0
          %652 = vmatpush.xpose.msra.mxu0 0.0
          %653 = vmatpush.xpose.msra.mxu0 0.0
          %654 = vmatpush.xpose.msra.mxu0 0.0
          %655 = vmatpush.xpose.msra.mxu0 0.0
          %656 = vmatpush.xpose.msra.mxu0 0.0
          %657 = vmatpush.xpose.msra.mxu0 0.0
          %658 = vmatpush.xpose.msra.mxu0 0.0
          %659 = vmatpush.xpose.msra.mxu0 0.0
          %660 = vmatpush.xpose.msra.mxu0 0.0
          %661 = vmatpush.xpose.msra.mxu0 %v645
          %662 = vmatpush.xpose.msra.mxu0 %v642
          %663 = vmatmul.f32.gmra.mxu0 %v639
          %v664 = vpop.f32.mrf.mxu0
          %v665 = vadd.f32 0.0, %v664
          %666 = vdwg.mxu0
          %vm667 = vcmask 130048
          %v668 = vsel %vm667, %v665, -inf
          %669 = vmax.xlane.f32.xlu0 %v668
          %v670 = vpop.xlane.xlu0 %669
          %v671 = vsub.f32 %v665, %v670
          %v672 = vmul.f32 %v671, 1.442695
          %v673 = vpow.pop %v672
          %v674 = vsel %vm667, %v673, 0.0
          %675 = vadd.xlane.f32.xlu0 %v674
          %v676 = vpop.xlane.xlu0 %675
          %v677 = vld [vmem:[#allocation3] sm:$0xff]
          %v678 = vld [vmem:[#allocation3 + $0x8] sm:$0xff]
          %v680 = vsel %vm667, %v673, 0
          %682 = vmatpush.msra.mxu0 0.0
          %683 = vmatpush.msra.mxu0 0.0
          %684 = vmatpush.msra.mxu0 0.0
          %685 = vmatpush.msra.mxu0 0.0
          %686 = vmatpush.msra.mxu0 0.0
          %687 = vmatpush.msra.mxu0 0.0
          %688 = vmatpush.msra.mxu0 0.0
          %689 = vmatpush.msra.mxu0 0.0
          %690 = vmatpush.msra.mxu0 0.0
          %691 = vmatpush.msra.mxu0 0.0
          %692 = vmatpush.msra.mxu0 0.0
          %693 = vmatpush.msra.mxu0 0.0
          %694 = vmatpush.msra.mxu0 0.0
          %695 = vmatpush.msra.mxu0 0.0
          %696 = vmatpush.msra.mxu0 %v678
          %697 = vmatpush.msra.mxu0 %v677
          %698 = vmatmul.f32.gmra.mxu0 %v680
          %v699 = vpop.f32.mrf.mxu0
          %v700 = vadd.f32 0.0, %v699
          %701 = vdwg.mxu0
          %v702 = vrcp.pop %v676
          %v703 = vmul.f32 %v700, %v702
          %704 = vst.msk [vmem:[#allocation4] sm:$0xff] %vm637, %v703
          %s705 = scalar_lea.vmem [#allocation2], 16
          %v706 = vld [vmem:[%s705] sm:$0xff]
          %v707 = vld [vmem:[%s705 + $0x8] sm:$0xff]
          %708 = vrot.lane.b32.xlu0 %v633, 120
          %v709 = vpop.permute.xlu0 %708
          %v710 = vsel %vm637, %v709, 0
          %v713 = vsel %vm637, %v706, 0
          %v716 = vsel %vm637, %v707, 0
          %718 = vmatpush.xpose.msra.mxu0 0.0
          %719 = vmatpush.xpose.msra.mxu0 0.0
          %720 = vmatpush.xpose.msra.mxu0 0.0
          %721 = vmatpush.xpose.msra.mxu0 0.0
          %722 = vmatpush.xpose.msra.mxu0 0.0
          %723 = vmatpush.xpose.msra.mxu0 0.0
          %724 = vmatpush.xpose.msra.mxu0 0.0
          %725 = vmatpush.xpose.msra.mxu0 0.0
          %726 = vmatpush.xpose.msra.mxu0 0.0
          %727 = vmatpush.xpose.msra.mxu0 0.0
          %728 = vmatpush.xpose.msra.mxu0 0.0
          %729 = vmatpush.xpose.msra.mxu0 0.0
          %730 = vmatpush.xpose.msra.mxu0 0.0
          %731 = vmatpush.xpose.msra.mxu0 0.0
          %732 = vmatpush.xpose.msra.mxu0 %v716
          %733 = vmatpush.xpose.msra.mxu0 %v713
          %734 = vmatmul.f32.gmra.mxu0 %v710
          %v735 = vpop.f32.mrf.mxu0
          %v736 = vadd.f32 0.0, %v735
          %737 = vdwg.mxu0
          %v738 = vsel %vm667, %v736, -inf
          %739 = vmax.xlane.f32.xlu0 %v738
          %v740 = vpop.xlane.xlu0 %739
          %v741 = vsub.f32 %v736, %v740
          %v742 = vmul.f32 %v741, 1.442695
          %v743 = vpow.pop %v742
          %v744 = vsel %vm667, %v743, 0.0
          %745 = vadd.xlane.f32.xlu0 %v744
          %v746 = vpop.xlane.xlu0 %745
          %s747 = scalar_lea.vmem [#allocation3], 16
          %v748 = vld [vmem:[%s747] sm:$0xff]
          %v749 = vld [vmem:[%s747 + $0x8] sm:$0xff]
          %v751 = vsel %vm667, %v743, 0
          %753 = vmatpush.msra.mxu0 0.0
          %754 = vmatpush.msra.mxu0 0.0
          %755 = vmatpush.msra.mxu0 0.0
          %756 = vmatpush.msra.mxu0 0.0
          %757 = vmatpush.msra.mxu0 0.0
          %758 = vmatpush.msra.mxu0 0.0
          %759 = vmatpush.msra.mxu0 0.0
          %760 = vmatpush.msra.mxu0 0.0
          %761 = vmatpush.msra.mxu0 0.0
          %762 = vmatpush.msra.mxu0 0.0
          %763 = vmatpush.msra.mxu0 0.0
          %764 = vmatpush.msra.mxu0 0.0
          %765 = vmatpush.msra.mxu0 0.0
          %766 = vmatpush.msra.mxu0 0.0
          %767 = vmatpush.msra.mxu0 %v749
          %768 = vmatpush.msra.mxu0 %v748
          %769 = vmatmul.f32.gmra.mxu0 %v751
          %v770 = vpop.f32.mrf.mxu0
          %v771 = vadd.f32 0.0, %v770
          %772 = vdwg.mxu0
          %v773 = vrcp.pop %v746
          %v774 = vmul.f32 %v771, %v773
          %776 = vrot.lane.b32.xlu0 %v774, 8
          %v777 = vpop.permute.xlu0 %776
          %vm779 = vcmask 130112
          %780 = vst.msk [vmem:[#allocation4] sm:$0xff] %vm779, %v777
          %s781 = scalar_lea.vmem [#allocation2], 32
          %v782 = vld [vmem:[%s781] sm:$0xff]
          %v783 = vld [vmem:[%s781 + $0x8] sm:$0xff]
          %784 = vrot.lane.b32.xlu0 %v633, 112
          %v785 = vpop.permute.xlu0 %784
          %v786 = vsel %vm637, %v785, 0
          %v789 = vsel %vm637, %v782, 0
          %v792 = vsel %vm637, %v783, 0
          %794 = vmatpush.xpose.msra.mxu0 0.0
          %795 = vmatpush.xpose.msra.mxu0 0.0
          %796 = vmatpush.xpose.msra.mxu0 0.0
          %797 = vmatpush.xpose.msra.mxu0 0.0
          %798 = vmatpush.xpose.msra.mxu0 0.0
          %799 = vmatpush.xpose.msra.mxu0 0.0
          %800 = vmatpush.xpose.msra.mxu0 0.0
          %801 = vmatpush.xpose.msra.mxu0 0.0
          %802 = vmatpush.xpose.msra.mxu0 0.0
          %803 = vmatpush.xpose.msra.mxu0 0.0
          %804 = vmatpush.xpose.msra.mxu0 0.0
          %805 = vmatpush.xpose.msra.mxu0 0.0
          %806 = vmatpush.xpose.msra.mxu0 0.0
          %807 = vmatpush.xpose.msra.mxu0 0.0
          %808 = vmatpush.xpose.msra.mxu0 %v792
          %809 = vmatpush.xpose.msra.mxu0 %v789
          %810 = vmatmul.f32.gmra.mxu0 %v786
          %v811 = vpop.f32.mrf.mxu0
          %v812 = vadd.f32 0.0, %v811
          %813 = vdwg.mxu0
          %v814 = vsel %vm667, %v812, -inf
          %815 = vmax.xlane.f32.xlu0 %v814
          %v816 = vpop.xlane.xlu0 %815
          %v817 = vsub.f32 %v812, %v816
          %v818 = vmul.f32 %v817, 1.442695
          %v819 = vpow.pop %v818
          %v820 = vsel %vm667, %v819, 0.0
          %821 = vadd.xlane.f32.xlu0 %v820
          %v822 = vpop.xlane.xlu0 %821
          %s823 = scalar_lea.vmem [#allocation3], 32
          %v824 = vld [vmem:[%s823] sm:$0xff]
          %v825 = vld [vmem:[%s823 + $0x8] sm:$0xff]
          %v827 = vsel %vm667, %v819, 0
          %829 = vmatpush.msra.mxu0 0.0
          %830 = vmatpush.msra.mxu0 0.0
          %831 = vmatpush.msra.mxu0 0.0
          %832 = vmatpush.msra.mxu0 0.0
          %833 = vmatpush.msra.mxu0 0.0
          %834 = vmatpush.msra.mxu0 0.0
          %835 = vmatpush.msra.mxu0 0.0
          %836 = vmatpush.msra.mxu0 0.0
          %837 = vmatpush.msra.mxu0 0.0
          %838 = vmatpush.msra.mxu0 0.0
          %839 = vmatpush.msra.mxu0 0.0
          %840 = vmatpush.msra.mxu0 0.0
          %841 = vmatpush.msra.mxu0 0.0
          %842 = vmatpush.msra.mxu0 0.0
          %843 = vmatpush.msra.mxu0 %v825
          %844 = vmatpush.msra.mxu0 %v824
          %845 = vmatmul.f32.gmra.mxu0 %v827
          %v846 = vpop.f32.mrf.mxu0
          %v847 = vadd.f32 0.0, %v846
          %848 = vdwg.mxu0
          %v849 = vrcp.pop %v822
          %v850 = vmul.f32 %v847, %v849
          %852 = vrot.lane.b32.xlu0 %v850, 16
          %v853 = vpop.permute.xlu0 %852
          %vm855 = vcmask 195712
          %856 = vst.msk [vmem:[#allocation4] sm:$0xff] %vm855, %v853
          %s857 = scalar_lea.vmem [#allocation2], 48
          %v858 = vld [vmem:[%s857] sm:$0xff]
          %v859 = vld [vmem:[%s857 + $0x8] sm:$0xff]
          %860 = vrot.lane.b32.xlu0 %v633, 104
          %v861 = vpop.permute.xlu0 %860
          %v862 = vsel %vm637, %v861, 0
          %v865 = vsel %vm637, %v858, 0
          %v868 = vsel %vm637, %v859, 0
          %870 = vmatpush.xpose.msra.mxu0 0.0
          %871 = vmatpush.xpose.msra.mxu0 0.0
          %872 = vmatpush.xpose.msra.mxu0 0.0
          %873 = vmatpush.xpose.msra.mxu0 0.0
          %874 = vmatpush.xpose.msra.mxu0 0.0
          %875 = vmatpush.xpose.msra.mxu0 0.0
          %876 = vmatpush.xpose.msra.mxu0 0.0
          %877 = vmatpush.xpose.msra.mxu0 0.0
          %878 = vmatpush.xpose.msra.mxu0 0.0
          %879 = vmatpush.xpose.msra.mxu0 0.0
          %880 = vmatpush.xpose.msra.mxu0 0.0
          %881 = vmatpush.xpose.msra.mxu0 0.0
          %882 = vmatpush.xpose.msra.mxu0 0.0
          %883 = vmatpush.xpose.msra.mxu0 0.0
          %884 = vmatpush.xpose.msra.mxu0 %v868
          %885 = vmatpush.xpose.msra.mxu0 %v865
          %886 = vmatmul.f32.gmra.mxu0 %v862
          %v887 = vpop.f32.mrf.mxu0
          %v888 = vadd.f32 0.0, %v887
          %889 = vdwg.mxu0
          %v890 = vsel %vm667, %v888, -inf
          %891 = vmax.xlane.f32.xlu0 %v890
          %v892 = vpop.xlane.xlu0 %891
          %v893 = vsub.f32 %v888, %v892
          %v894 = vmul.f32 %v893, 1.442695
          %v895 = vpow.pop %v894
          %v896 = vsel %vm667, %v895, 0.0
          %897 = vadd.xlane.f32.xlu0 %v896
          %v898 = vpop.xlane.xlu0 %897
          %s899 = scalar_lea.vmem [#allocation3], 48
          %v900 = vld [vmem:[%s899] sm:$0xff]
          %v901 = vld [vmem:[%s899 + $0x8] sm:$0xff]
          %v903 = vsel %vm667, %v895, 0
          %905 = vmatpush.msra.mxu0 0.0
          %906 = vmatpush.msra.mxu0 0.0
          %907 = vmatpush.msra.mxu0 0.0
          %908 = vmatpush.msra.mxu0 0.0
          %909 = vmatpush.msra.mxu0 0.0
          %910 = vmatpush.msra.mxu0 0.0
          %911 = vmatpush.msra.mxu0 0.0
          %912 = vmatpush.msra.mxu0 0.0
          %913 = vmatpush.msra.mxu0 0.0
          %914 = vmatpush.msra.mxu0 0.0
          %915 = vmatpush.msra.mxu0 0.0
          %916 = vmatpush.msra.mxu0 0.0
          %917 = vmatpush.msra.mxu0 0.0
          %918 = vmatpush.msra.mxu0 0.0
          %919 = vmatpush.msra.mxu0 %v901
          %920 = vmatpush.msra.mxu0 %v900
          %921 = vmatmul.f32.gmra.mxu0 %v903
          %v922 = vpop.f32.mrf.mxu0
          %v923 = vadd.f32 0.0, %v922
          %924 = vdwg.mxu0
          %v925 = vrcp.pop %v898
          %v926 = vmul.f32 %v923, %v925
          %928 = vrot.lane.b32.xlu0 %v926, 24
          %v929 = vpop.permute.xlu0 %928
          %vm931 = vcmask 261312
          %932 = vst.msk [vmem:[#allocation4] sm:$0xff] %vm931, %v929
          %v933 = vld [vmem:[#allocation4] sm:$0xff]
          %v934 = vld [vmem:[%s5] sm:$0xff]
          %v935 = vld [vmem:[%s5 + $0x8] sm:$0xff]
          %v936 = vld [vmem:[%s5 + $0x10] sm:$0xff]
          %v937 = vld [vmem:[%s5 + $0x18] sm:$0xff]
          %v938 = vld [vmem:[%s6] sm:$0x1]
          %v940 = vperm.slane %v938, 0
          %v943 = vsel %vm492, %v933, 0
          %945 = vmatpush.msra.mxu0 0.0
          %946 = vmatpush.msra.mxu0 0.0
          %947 = vmatpush.msra.mxu0 0.0
          %948 = vmatpush.msra.mxu0 0.0
          %949 = vmatpush.msra.mxu0 0.0
          %950 = vmatpush.msra.mxu0 0.0
          %951 = vmatpush.msra.mxu0 0.0
          %952 = vmatpush.msra.mxu0 0.0
          %953 = vmatpush.msra.mxu0 0.0
          %954 = vmatpush.msra.mxu0 0.0
          %955 = vmatpush.msra.mxu0 0.0
          %956 = vmatpush.msra.mxu0 0.0
          %957 = vmatpush.msra.mxu0 %v937
          %958 = vmatpush.msra.mxu0 %v936
          %959 = vmatpush.msra.mxu0 %v935
          %960 = vmatpush.msra.mxu0 %v934
          %961 = vmatmul.f32.gmra.mxu0 %v943
          %v962 = vpop.f32.mrf.mxu0
          %v963 = vadd.f32 %v940, %v962
          %964 = vdwg.mxu0
          %v965 = vadd.f32 %v491, %v963
          %v966 = vld [vmem:[%s7] sm:$0x1]
          %v967 = vld [vmem:[%s8] sm:$0x1]
          %v968 = vsel %vm492, %v965, 0.0
          %969 = vadd.xlane.f32.xlu0 %v968
          %v970 = vpop.xlane.xlu0 %969
          %v971 = vmul.f32 %v970, %v502
          %v972 = vsub.f32 %v965, %v971
          %v973 = vmul.f32 %v972, %v972
          %v974 = vsel %vm492, %v973, 0.0
          %975 = vadd.xlane.f32.xlu0 %v974
          %v976 = vpop.xlane.xlu0 %975
          %v977 = vmul.f32 %v976, %v502
          %v978 = vadd.f32 %v977, 1e-05
          %v979 = vrsqrt.pop %v978
          %v980 = vmul.f32 %v979, %v978
          %v981 = vmul.f32 %v980, %v979
          %v982 = vmul.f32 0.5, %v981
          %v983 = vsub.f32 1.5, %v982
          %v984 = vmul.f32 %v979, %v983
          %vm985 = vweird.f32 %v978
          %vm986 = vweird.f32 %v979
          %vm987 = vmor %vm985, %vm986
          %v988 = vsel %vm987, %v979, %v984
          %v989 = vmul.f32 %v972, %v988
          %v991 = vperm.slane %v966, 0
          %v993 = vmul.f32 %v989, %v991
          %v995 = vperm.slane %v967, 0
          %v997 = vadd.f32 %v993, %v995
          %v998 = vld [vmem:[%s9] sm:$0xff]
          %v999 = vld [vmem:[%s9 + $0x8] sm:$0xff]
          %v1000 = vld [vmem:[%s9 + $0x10] sm:$0xff]
          %v1001 = vld [vmem:[%s9 + $0x18] sm:$0xff]
          %v1002 = vld [vmem:[%s10] sm:$0x1]
          %v1004 = vperm.slane %v1002, 0
          %v1007 = vsel %vm492, %v997, 0
          %1009 = vmatpush.msra.mxu0 0.0
          %1010 = vmatpush.msra.mxu0 0.0
          %1011 = vmatpush.msra.mxu0 0.0
          %1012 = vmatpush.msra.mxu0 0.0
          %1013 = vmatpush.msra.mxu0 0.0
          %1014 = vmatpush.msra.mxu0 0.0
          %1015 = vmatpush.msra.mxu0 0.0
          %1016 = vmatpush.msra.mxu0 0.0
          %1017 = vmatpush.msra.mxu0 0.0
          %1018 = vmatpush.msra.mxu0 0.0
          %1019 = vmatpush.msra.mxu0 0.0
          %1020 = vmatpush.msra.mxu0 0.0
          %1021 = vmatpush.msra.mxu0 %v1001
          %1022 = vmatpush.msra.mxu0 %v1000
          %1023 = vmatpush.msra.mxu0 %v999
          %1024 = vmatpush.msra.mxu0 %v998
          %1025 = vmatmul.f32.gmra.mxu0 %v1007
          %v1026 = vpop.f32.mrf.mxu0
          %v1027 = vadd.f32 %v1004, %v1026
          %1028 = vdwg.mxu0
          %vm1029 = vcmp.ge.f32.partialorder %v1027, 0.0
          %v1030 = vmul.f32 %v1027, 0.2
          %v1031 = vsel %vm1029, %v1027, %v1030
          %v1032 = vld [vmem:[%s11] sm:$0xff]
          %v1033 = vld [vmem:[%s11 + $0x8] sm:$0xff]
          %v1034 = vld [vmem:[%s11 + $0x10] sm:$0xff]
          %v1035 = vld [vmem:[%s11 + $0x18] sm:$0xff]
          %v1036 = vld [vmem:[%s11 + $0x20] sm:$0xff]
          %v1037 = vld [vmem:[%s11 + $0x28] sm:$0xff]
          %v1038 = vld [vmem:[%s11 + $0x30] sm:$0xff]
          %v1039 = vld [vmem:[%s11 + $0x38] sm:$0xff]
          %v1040 = vld [vmem:[%s11 + $0x40] sm:$0xff]
          %v1041 = vld [vmem:[%s11 + $0x48] sm:$0xff]
          %v1042 = vld [vmem:[%s11 + $0x50] sm:$0xff]
          %v1043 = vld [vmem:[%s11 + $0x58] sm:$0xff]
          %v1044 = vld [vmem:[%s11 + $0x60] sm:$0xff]
          %v1045 = vld [vmem:[%s11 + $0x68] sm:$0xff]
          %v1046 = vld [vmem:[%s11 + $0x70] sm:$0xff]
          %v1047 = vld [vmem:[%s11 + $0x78] sm:$0xff]
          %v1048 = vld [vmem:[%s12] sm:$0x1]
          %v1050 = vperm.slane %v1048, 0
          %1052 = vmatpush.msra.mxu0 %v1047
          %1053 = vmatpush.msra.mxu0 %v1046
          %1054 = vmatpush.msra.mxu0 %v1045
          %1055 = vmatpush.msra.mxu0 %v1044
          %1056 = vmatpush.msra.mxu0 %v1043
          %1057 = vmatpush.msra.mxu0 %v1042
          %1058 = vmatpush.msra.mxu0 %v1041
          %1059 = vmatpush.msra.mxu0 %v1040
          %1060 = vmatpush.msra.mxu0 %v1039
          %1061 = vmatpush.msra.mxu0 %v1038
          %1062 = vmatpush.msra.mxu0 %v1037
          %1063 = vmatpush.msra.mxu0 %v1036
          %1064 = vmatpush.msra.mxu0 %v1035
          %1065 = vmatpush.msra.mxu0 %v1034
          %1066 = vmatpush.msra.mxu0 %v1033
          %1067 = vmatpush.msra.mxu0 %v1032
          %1068 = vmatmul.f32.gmra.mxu0 %v1031
          %v1069 = vpop.f32.mrf.mxu0
          %v1070 = vadd.f32 %v1050, %v1069
          %1071 = vdwg.mxu0
          %v1072 = vadd.f32 %v965, %v1070
          %1073 = vst.msk [vmem:[%s479] sm:$0xff] %vm492, %v1072
        $region84: #{tpu_custom_call.1} parent=71 // pred_fallthru
          _
        %s1074 = sand.u32 %s339, 1
        %s1075 = scalar_lea.sflag [#allocation7], %s1074
        %s1076 = sand.u32 %s339, 1
        %s1077 = smul.addr %s1076, 8
        %s1078 = scalar_lea.vmem [#allocation8], %s1077
        // Predicated region
        $region85: #{tpu_custom_call.1} parent=71 // pred_check
          %p1079 = pneg %p349
        $region86: #{tpu_custom_call.1} parent=71 // pred_check_branch
          %1081 = sbr.rel (%p1079) target = $region88
        $region87: #{tpu_custom_call.1} parent=71 // pred_region
          %s1082 = smul.u32 %s35, %s34
          %1084 = vsyncadd %s1075, 0
          %s1085 = smul.addr %s33, 2
          %s1086 = sadd.s32 %s1082, %s1085
          %s1087 = smul.addr %s1086, 8
          %s1088 = scalar_lea.hbm %s13, %s1087
          %s1090 = sshll.u32 %s1078, 4
          %s1091 = int_to_ptr.vmem [resolvable:$true] %s1090
          %s1092 = sshll.u32 %s1088, 4
          %s1093 = int_to_ptr.hbm [resolvable:$true] %s1092
          %1095 = dma.vmem_to_hbm [thread:$0]  %s1091, 128, %s1093, %s1075
        $region88: #{tpu_custom_call.1} parent=71 // pred_fallthru
          _
      $region72: #{tpu_custom_call.1} parent=5 // pred_fallthru
        _
      %p1096 = scmp.le.s32.totalorder 2, %s23
      // Predicated region
      $region89: #{tpu_custom_call.1} parent=5 // pred_check
        %p1097 = pneg %p1096
      $region90: #{tpu_custom_call.1} parent=5 // pred_check_branch
        %1099 = sbr.rel (%p1097) target = $region92
      $region91: #{tpu_custom_call.1} parent=5 // pred_region
        %s1100 = ssub.s32 %s23, 2
        // Predicated region
        $region93: #{tpu_custom_call.1} parent=91 // pred_check
          %p1101 = pneg %p355
        $region94: #{tpu_custom_call.1} parent=91 // pred_check_branch
          %1103 = sbr.rel (%p1101) target = $region96
        $region95: #{tpu_custom_call.1} parent=91 // pred_region
          %s1104 = sand.u32 %s340, 1
          %s1105 = scalar_lea.sflag [#allocation7], %s1104
          %s1106 = sand.u32 %s340, 1
          %s1107 = smul.addr %s1106, 8
          %s1108 = scalar_lea.vmem [#allocation8], %s1107
          %1110 = dma.done %s1105, 128
        $region96: #{tpu_custom_call.1} parent=91 // pred_fallthru
          _
      $region92: #{tpu_custom_call.1} parent=5 // pred_fallthru
        _
    $region6: #{tpu_custom_call.1} parent=1 // loop_footer
      %s27 = sadd.s32 1, %s23
    $region7: #{tpu_custom_call.1} parent=1 // loop_footer_branch
      %22 = sbr.rel target = $region3
    $region8: #{tpu_custom_call.1} parent=1 // loop_exit
      _
    %1111 = vsyncpa [#allocation6], 1
    %s1112 = scalar_lea.sflag [#allocation6], 1
    %1113 = vsyncpa %s1112, 1
    %1114 = vsyncpa [#allocation7], 1
    %s1115 = scalar_lea.sflag [#allocation7], 1
    %1116 = vsyncpa %s1115, 1

</llo_original>
